<compile_context>
chip_gen: v6e
topology: v6e:2x2x1
jax: 0.10.0
libtpu: 0.0.40
codegen_flags: <defaults>
</compile_context>

<pallas_src>
import functools
import math

import jax
import jax.numpy as jnp
from jax import lax
from jax.experimental import pallas as pl
from jax.experimental.pallas import tpu as pltpu

EPS = 1e-5          # nn.BatchNorm2d default eps
NEG_SLOPE = 0.1     # nn.LeakyReLU(0.1)


def _round_up(v, mult):
    return (v + mult - 1) // mult * mult


def _pad_axis_to(a, axis, size):
    pad = size - a.shape[axis]
    if pad == 0:
        return a
    widths = [(0, 0)] * a.ndim
    widths[axis] = (0, pad)
    return jnp.pad(a, widths)


# --------------------------- in-kernel helpers -------------------------------

def _affine_lrelu(a, scale, shift):
    # Folded BatchNorm apply (per-channel affine) + LeakyReLU(0.1), all f32.
    y = a * scale + shift
    return jnp.maximum(y, NEG_SLOPE * y)


def _conv3x3_taps(y, w_ref, img_h, img_w):
    """3x3 SAME conv on (Cin, TM) activations flattened as n*H*W + y*W + x.

    y      : (Cin, TM) f32, TM covering whole images only.
    w_ref  : (9, Cout, Cin) bf16 ref, tap-major (k = dy*3 + dx).
    Returns (Cout, TM) f32.  Taps are XLU lane rolls of y; wrap-around /
    cross-image reads are zeroed with boundary masks (exact zero padding).
    Per-tap bf16 matmuls accumulate in f32 registers (no im2col scratch slab).
    """
    tm = y.shape[1]
    cout = w_ref.shape[1]
    hw = img_h * img_w

    col = lax.broadcasted_iota(jnp.int32, (1, tm), 1)
    col_img = col % hw                      # y*W + x inside one image
    col_row = col % img_w                   # x inside one row
    y_ge1 = (col_img >= img_w).astype(jnp.float32)               # out y >= 1
    y_leh = (col_img < (img_h - 1) * img_w).astype(jnp.float32)  # out y <= H-2
    x_ge1 = (col_row >= 1).astype(jnp.float32)                   # out x >= 1
    x_lew = (col_row < img_w - 1).astype(jnp.float32)            # out x <= W-2
    # Combined per-tap masks (corner products built once, each used once).
    masks = {
        (0, 0): y_ge1 * x_ge1, (0, 1): y_ge1, (0, 2): y_ge1 * x_lew,
        (1, 0): x_ge1,         (1, 1): None,  (1, 2): x_lew,
        (2, 0): y_leh * x_ge1, (2, 1): y_leh, (2, 2): y_leh * x_lew,
    }

    acc = jnp.zeros((cout, tm), jnp.float32)
    for dy in range(3):
        for dx in range(3):
            k = dy * 3 + dx
            shift = (dy - 1) * img_w + (dx - 1)
            # tap[i] = y[(i + shift) mod TM]  (XLU lane rotation)
            tap = y if shift == 0 else pltpu.roll(y, shift=(-shift) % tm, axis=1)
            mk = masks[(dy, dx)]
            if mk is not None:
                tap = tap * mk                        # (1, TM) broadcast
            acc = acc + jnp.dot(w_ref[k], tap.astype(jnp.bfloat16),
                                preferred_element_type=jnp.float32)
    return acc


# -------------------------------- kernels ------------------------------------

def stats_kernel(x_ref, sum_ref, ssq_ref):
    # Per-tile partial BatchNorm statistics of the block input x.
    x = x_ref[...]                                    # (C, TM) f32
    sum_ref[0] = jnp.sum(x, axis=1, keepdims=True)
    ssq_ref[0] = jnp.sum(x * x, axis=1, keepdims=True)


def conv_stage_kernel(scale_ref, shift_ref, w_ref, a_ref,
                      o_ref, sum_ref, ssq_ref, *, img_h, img_w, m_true,
                      lane_pad):
    # One (BN-affine -> LeakyReLU -> Conv3x3) stage on one image-group tile,
    # plus per-tile partial statistics of its own output (feeds the next BN).
    y = _affine_lrelu(a_ref[...], scale_ref[...], shift_ref[...])
    acc = _conv3x3_taps(y, w_ref, img_h, img_w)       # (Cout, TM) f32
    if lane_pad:
        # Zero images were appended so tiles are whole images; exclude their
        # (garbage) conv outputs from the batch statistics.
        tm = acc.shape[1]
        col = lax.broadcasted_iota(jnp.int32, (1, tm), 1) + pl.program_id(0) * tm
        valid = (col < m_true).astype(jnp.float32)
        masked = acc * valid
        sum_ref[0] = jnp.sum(masked, axis=1, keepdims=True)
        ssq_ref[0] = jnp.sum(masked * acc, axis=1, keepdims=True)
    else:
        sum_ref[0] = jnp.sum(acc, axis=1, keepdims=True)
        ssq_ref[0] = jnp.sum(acc * acc, axis=1, keepdims=True)
    o_ref[...] = acc                                  # lane-dense unmasked store


def final_stage_kernel(scale_ref, shift_ref, w_ref, wsk_ref, bsk_ref,
                       a_ref, x_ref, o_ref, *, img_h, img_w):
    # Last conv stage + fused 1x1 skip.  The skip is computed here, last, so
    # no (Cout, M) skip value is held live across the other stages.
    y = _affine_lrelu(a_ref[...], scale_ref[...], shift_ref[...])
    acc = _conv3x3_taps(y, w_ref, img_h, img_w)       # (Cout, TM) f32
    skip = jnp.dot(wsk_ref[...], x_ref[...].astype(jnp.bfloat16),
                   preferred_element_type=jnp.float32) + bsk_ref[...]
    o_ref[...] = acc + skip


# -------------------------------- wrapper -------------------------------------

def _bn_scale_shift(psum, pssq, gamma_col, beta_col, inv_m):
    # Reduce per-tile partials and fold BN into a per-channel affine.
    # TODO(synk): single-pass variance (E[x^2]-E[x]^2, clamped at 0); switch to
    # a shifted / two-pass reduction if inputs can be far from zero-mean.
    s = jnp.sum(psum, axis=0)                         # (C, 1)
    ss = jnp.sum(pssq, axis=0)                        # (C, 1)
    mean = s * inv_m
    var = jnp.maximum(ss * inv_m - mean * mean, 0.0)
    scale = gamma_col * lax.rsqrt(var + EPS)
    shift = beta_col - mean * scale
    return scale, shift


def _pick_images_per_tile(n, hw, cin_p, cout_p, target_lanes, max_tile_bytes):
    # Whole-image groups, rounded so the tile lane width is a multiple of 128,
    # grown toward the lane-width sweet spot while staying under the per-step
    # VMEM byte cap (keeps v7x's 64 MiB budget safe after double-buffering).
    base = 128 // math.gcd(hw, 128)
    ipt = base
    bytes_per_img = (cin_p + cout_p) * hw * 4
    while (ipt < n
           and (ipt + base) * hw <= target_lanes
           and (ipt + base) * bytes_per_img <= max_tile_bytes):
        ipt += base
    return ipt


def _vmem_limit_bytes(tile_in, tile_out, const_bytes):
    # Double-buffered in/out tiles + resident constants + slack.  Capped at
    # 48 MiB so the same config stays inside v7x's 64 MiB physical VMEM;
    # v5e/v6e (128 MiB) simply get whatever the chosen tile actually needs.
    need = 2 * (tile_in + tile_out) + const_bytes + (4 << 20)
    return int(min(max(need, 16 << 20), 48 << 20))


def resblock_forward_cm(x_cm, n, h, w, p, *, target_tile_lanes=2048,
                        max_tile_bytes=6 << 20):
    """ResBlock forward in channel-major layout.

    x_cm : (Cin, N*H*W) f32 -- channels in sublanes, flattened spatial in
           lanes (index = n*H*W + y*W + x).  Returns (Cout, N*H*W) f32.
    Stacked ResBlocks should chain this entry point directly so activations
    stay in the lane-dense (C, M) layout between blocks (NCHW transposes only
    at the model boundary).
    """
    cin = x_cm.shape[0]
    cout = p["w1"].shape[-1]
    hw = h * w
    m_true = n * hw
    cin_p, cout_p = _round_up(cin, 8), _round_up(cout, 8)
    f32 = jnp.float32

    ipt = _pick_images_per_tile(n, hw, cin_p, cout_p,
                                target_tile_lanes, max_tile_bytes)
    n_pad = _round_up(n, ipt)
    tiles = n_pad // ipt
    tile_m = ipt * hw                    # multiple of 128 by construction
    m_pad = n_pad * hw
    lane_pad = m_pad != m_true
    inv_m = 1.0 / float(m_true)          # stats always divide by the true N*H*W

    # ---- parameter packing (channel dims zero-padded to x8, weights bf16) ---
    xp = _pad_axis_to(_pad_axis_to(x_cm, 0, cin_p), 1, m_pad)   # (Cin_p, M_p)

    def conv_taps(wh, ci_p):
        # HWIO (3,3,Ci,Co) -> (9, Co_p, Ci_p) bf16, tap-major (k = dy*3+dx).
        whp = _pad_axis_to(_pad_axis_to(wh, 2, ci_p), 3, cout_p)
        return (whp.transpose(0, 1, 3, 2)
                   .reshape(9, cout_p, ci_p).astype(jnp.bfloat16))

    col = lambda v, c: _pad_axis_to(v.reshape(-1), 0, c).reshape(c, 1).astype(f32)
    w1 = conv_taps(p["w1"], cin_p)
    w2 = conv_taps(p["w2"], cout_p)
    w3 = conv_taps(p["w3"], cout_p)
    wsk = (_pad_axis_to(_pad_axis_to(p["wskip"], 0, cin_p), 1, cout_p)
           .T.astype(jnp.bfloat16))                            # (Co_p, Ci_p)
    bsk = col(p["bskip"], cout_p)
    gammas = [col(p["g1"], cin_p), col(p["g2"], cout_p), col(p["g3"], cout_p)]
    betas = [col(p["b1"], cin_p), col(p["b2"], cout_p), col(p["b3"], cout_p)]

    # ---- shared BlockSpecs ---------------------------------------------------
    def act_spec(c):           # activation tile: channels x image-group lanes
        return pl.BlockSpec((c, tile_m), lambda i: (0, i))

    def const_spec(shape):     # small per-call constants, same block every step
        nd = len(shape)
        return pl.BlockSpec(shape, lambda i, _nd=nd: (0,) * _nd)

    def stat_spec(c):          # per-tile partial statistics
        return pl.BlockSpec((1, c, 1), lambda i: (i, 0, 0))

    const_bytes = (w1.size + w2.size + w3.size + wsk.size) * 2 + 4096
    cparams = pltpu.CompilerParams(
        dimension_semantics=("parallel",),
        vmem_limit_bytes=_vmem_limit_bytes(cin_p * tile_m * 4,
                                           cout_p * tile_m * 4, const_bytes))

    # ---- pass 1: BN1 statistics of x (per-tile partials, reduced below) -----
    s1p, ss1p = pl.pallas_call(
        stats_kernel,
        grid=(tiles,),
        in_specs=[act_spec(cin_p)],
        out_specs=(stat_spec(cin_p), stat_spec(cin_p)),
        out_shape=(jax.ShapeDtypeStruct((tiles, cin_p, 1), f32),
                   jax.ShapeDtypeStruct((tiles, cin_p, 1), f32)),
        compiler_params=cparams,
    )(xp)
    scale1, shift1 = _bn_scale_shift(s1p, ss1p, gammas[0], betas[0], inv_m)

    def conv_stage(a, scale, shift, w_taps, ci_p):
        kern = functools.partial(conv_stage_kernel, img_h=h, img_w=w,
                                 m_true=m_true, lane_pad=lane_pad)
        return pl.pallas_call(
            kern,
            grid=(tiles,),
            in_specs=[const_spec((ci_p, 1)), const_spec((ci_p, 1)),
                      const_spec((9, cout_p, ci_p)), act_spec(ci_p)],
            out_specs=(act_spec(cout_p), stat_spec(cout_p), stat_spec(cout_p)),
            out_shape=(jax.ShapeDtypeStruct((cout_p, m_pad), f32),
                       jax.ShapeDtypeStruct((tiles, cout_p, 1), f32),
                       jax.ShapeDtypeStruct((tiles, cout_p, 1), f32)),
            compiler_params=cparams,
        )(scale, shift, w_taps, a)

    # ---- pass 2: BN1 -> LReLU -> Conv1 (+ BN2 partial statistics) ----------
    t1, s2p, ss2p = conv_stage(xp, scale1, shift1, w1, cin_p)
    scale2, shift2 = _bn_scale_shift(s2p, ss2p, gammas[1], betas[1], inv_m)

    # ---- pass 3: BN2 -> LReLU -> Conv2 (+ BN3 partial statistics) ----------
    t2, s3p, ss3p = conv_stage(t1, scale2, shift2, w2, cout_p)
    scale3, shift3 = _bn_scale_shift(s3p, ss3p, gammas[2], betas[2], inv_m)

    # ---- pass 4: BN3 -> LReLU -> Conv3 + fused 1x1 skip (computed last) ----
    out_cm = pl.pallas_call(
        functools.partial(final_stage_kernel, img_h=h, img_w=w),
        grid=(tiles,),
        in_specs=[const_spec((cout_p, 1)), const_spec((cout_p, 1)),
                  const_spec((9, cout_p, cout_p)),
                  const_spec((cout_p, cin_p)), const_spec((cout_p, 1)),
                  act_spec(cout_p), act_spec(cin_p)],
        out_specs=act_spec(cout_p),
        out_shape=jax.ShapeDtypeStruct((cout_p, m_pad), f32),
        compiler_params=cparams,
    )(scale3, shift3, w3, wsk, bsk, t2, xp)

    # TODO(synk): BatchNorm running-stat updates / eval-mode running statistics
    # are not reproduced; forward matches the PyTorch module in train() mode.
    return out_cm[:cout, :m_true]


def resblock_forward(x_nchw, p, *, target_tile_lanes=2048):
    # NCHW adapter around the channel-major core.  When ResBlocks are stacked,
    # call resblock_forward_cm directly so activations stay in (C, N*H*W)
    # between blocks and the HBM transpose round-trips happen only at the
    # model boundary.
    n, cin, h, w = x_nchw.shape
    x_cm = x_nchw.transpose(1, 0, 2, 3).reshape(cin, n * h * w)
    out_cm = resblock_forward_cm(x_cm, n, h, w, p,
                                 target_tile_lanes=target_tile_lanes)
    cout = out_cm.shape[0]
    return out_cm.reshape(cout, n, h, w).transpose(1, 0, 2, 3)   # NCHW


# ------------------------------- reference ------------------------------------

def resblock_ref(x, p):
    # Pure-JAX f32 reference (same math as the PyTorch module in train mode).
    def bn(t, g, b):
        mu = jnp.mean(t, axis=(0, 2, 3), keepdims=True)
        var = jnp.mean((t - mu) ** 2, axis=(0, 2, 3), keepdims=True)
        return (g.reshape(1, -1, 1, 1) * (t - mu) / jnp.sqrt(var + EPS)
                + b.reshape(1, -1, 1, 1))

    def conv(t, wh):
        return lax.conv_general_dilated(
            t, wh, (1, 1), "SAME", dimension_numbers=("NCHW", "HWIO", "NCHW"))

    lrelu = lambda t: jnp.where(t > 0, t, NEG_SLOPE * t)
    skip = (jnp.einsum("nchw,cd->ndhw", x, p["wskip"])
            + p["bskip"].reshape(1, -1, 1, 1))
    t = conv(lrelu(bn(x, p["g1"], p["b1"])), p["w1"])
    t = conv(lrelu(bn(t, p["g2"], p["b2"])), p["w2"])
    t = conv(lrelu(bn(t, p["g3"], p["b3"])), p["w3"])
    return skip + t


if __name__ == "__main__":
    N, H, W = 2, 16, 16
    nFin, nFout = 4, 8

    key = jax.random.PRNGKey(0)
    ks = jax.random.split(key, 12)
    x = jax.random.normal(ks[0], (N, nFin, H, W), jnp.float32)   # NCHW

    params = dict(
        w1=0.2 * jax.random.normal(ks[1], (3, 3, nFin, nFout), jnp.float32),
        w2=0.2 * jax.random.normal(ks[2], (3, 3, nFout, nFout), jnp.float32),
        w3=0.2 * jax.random.normal(ks[3], (3, 3, nFout, nFout), jnp.float32),
        wskip=0.2 * jax.random.normal(ks[4], (nFin, nFout), jnp.float32),
        bskip=0.1 * jax.random.normal(ks[5], (nFout,), jnp.float32),
        g1=1.0 + 0.1 * jax.random.normal(ks[6], (nFin,), jnp.float32),
        b1=0.1 * jax.random.normal(ks[7], (nFin,), jnp.float32),
        g2=1.0 + 0.1 * jax.random.normal(ks[8], (nFout,), jnp.float32),
        b2=0.1 * jax.random.normal(ks[9], (nFout,), jnp.float32),
        g3=1.0 + 0.1 * jax.random.normal(ks[10], (nFout,), jnp.float32),
        b3=0.1 * jax.random.normal(ks[11], (nFout,), jnp.float32),
    )

    # target_tile_lanes=256 -> one image per tile -> a 2-step grid even at this
    # toy size, exercising the tiled pipeline and partial-stat reduction path.
    fwd = jax.jit(functools.partial(resblock_forward, target_tile_lanes=256))
    out = fwd(x, params)
    jax.block_until_ready(out)

    ref = resblock_ref(x, params)
    err = float(jnp.max(jnp.abs(out - ref)))
    rel = float(jnp.sqrt(jnp.sum((out - ref) ** 2) / jnp.sum(ref ** 2)))
    # bf16 MXU operands (per perf review) leave ~1e-2-scale worst-case element
    # error over three stacked convs on unit-scale activations; the relative
    # Frobenius error stays at the few-1e-3 level.
    assert err < 3e-2 and rel < 1e-2, f"mismatch: max abs {err}, rel {rel}"

    print("KERNEL_OK")
</pallas_src>

<mosaic_0001>
module attributes {stable_mosaic.version = 11 : i64} {
  func.func @final_stage_kernel(%arg0: i32, %arg1: memref<8x1xf32, #tpu.memory_space<vmem>>, %arg2: memref<8x1xf32, #tpu.memory_space<vmem>>, %arg3: memref<9x8x8xbf16, #tpu.memory_space<vmem>>, %arg4: memref<8x8xbf16, #tpu.memory_space<vmem>>, %arg5: memref<8x1xf32, #tpu.memory_space<vmem>>, %arg6: memref<8x256xf32, #tpu.memory_space<vmem>>, %arg7: memref<8x256xf32, #tpu.memory_space<vmem>>, %arg8: memref<8x256xf32, #tpu.memory_space<vmem>>) attributes {dimension_semantics = [#tpu.dimension_semantics<parallel>], iteration_bounds = array<i64: 2>, scalar_prefetch = 0 : i64, scratch_operands = 0 : i64, tpu.core_type = #tpu.core_type<tc>, window_params = [{pipeline_mode = #tpu.pipeline_mode<synchronous>, transform_indices = @transform_0, window_bounds = array<i64: 8, 1>}, {pipeline_mode = #tpu.pipeline_mode<synchronous>, transform_indices = @transform_1, window_bounds = array<i64: 8, 1>}, {pipeline_mode = #tpu.pipeline_mode<synchronous>, transform_indices = @transform_2, window_bounds = array<i64: 9, 8, 8>}, {pipeline_mode = #tpu.pipeline_mode<synchronous>, transform_indices = @transform_3, window_bounds = array<i64: 8, 8>}, {pipeline_mode = #tpu.pipeline_mode<synchronous>, transform_indices = @transform_4, window_bounds = array<i64: 8, 1>}, {transform_indices = @transform_5, window_bounds = array<i64: 8, 256>}, {transform_indices = @transform_6, window_bounds = array<i64: 8, 256>}, {transform_indices = @transform_7, window_bounds = array<i64: 8, 256>}]} {
    %c0 = arith.constant 0 : index
    %c0_0 = arith.constant 0 : index
    %0 = vector.load %arg6[%c0, %c0_0] : memref<8x256xf32, #tpu.memory_space<vmem>>, vector<8x256xf32>
    %c0_1 = arith.constant 0 : index
    %c0_2 = arith.constant 0 : index
    %1 = vector.load %arg1[%c0_1, %c0_2] : memref<8x1xf32, #tpu.memory_space<vmem>>, vector<8x1xf32>
    %c0_3 = arith.constant 0 : index
    %c0_4 = arith.constant 0 : index
    %2 = vector.load %arg2[%c0_3, %c0_4] : memref<8x1xf32, #tpu.memory_space<vmem>>, vector<8x1xf32>
    %3 = vector.broadcast %1 : vector<8x1xf32> to vector<8x256xf32>
    %4 = arith.mulf %0, %3 : vector<8x256xf32>
    %5 = vector.broadcast %2 : vector<8x1xf32> to vector<8x256xf32>
    %6 = arith.addf %4, %5 : vector<8x256xf32>
    %cst = arith.constant 1.000000e-01 : f32
    %7 = vector.broadcast %cst : f32 to vector<8x256xf32>
    %8 = arith.mulf %7, %6 : vector<8x256xf32>
    %9 = arith.maximumf %6, %8 : vector<8x256xf32>
    %10 = tpu.iota {dimensions = array<i32: 1>} : vector<1x256xi32>
    %c256_i32 = arith.constant 256 : i32
    %c0_i32 = arith.constant 0 : i32
    %11 = arith.cmpi eq, %c256_i32, %c0_i32 : i32
    %c1_i32 = arith.constant 1 : i32
    %12 = arith.select %11, %c1_i32, %c256_i32 : i32
    %13 = vector.broadcast %12 : i32 to vector<1x256xi32>
    %14 = arith.remsi %10, %13 : vector<1x256xi32>
    %c0_i32_5 = arith.constant 0 : i32
    %15 = vector.broadcast %c0_i32_5 : i32 to vector<1x256xi32>
    %16 = arith.cmpi ne, %14, %15 : vector<1x256xi32>
    %c0_i32_6 = arith.constant 0 : i32
    %17 = vector.broadcast %c0_i32_6 : i32 to vector<1x256xi32>
    %18 = arith.cmpi slt, %14, %17 : vector<1x256xi32>
    %c0_i32_7 = arith.constant 0 : i32
    %19 = arith.cmpi slt, %12, %c0_i32_7 : i32
    %20 = vector.broadcast %19 : i1 to vector<1x256xi1>
    %21 = vector.broadcast %20 : vector<1x256xi1> to vector<1x256xi1>
    %22 = arith.xori %18, %21 : vector<1x256xi1>
    %23 = arith.andi %22, %16 : vector<1x256xi1>
    %24 = vector.broadcast %12 : i32 to vector<1x256xi32>
    %25 = arith.addi %14, %24 : vector<1x256xi32>
    %26 = arith.select %23, %25, %14 : vector<1x256xi1>, vector<1x256xi32>
    %c16_i32 = arith.constant 16 : i32
    %c0_i32_8 = arith.constant 0 : i32
    %27 = arith.cmpi eq, %c16_i32, %c0_i32_8 : i32
    %c1_i32_9 = arith.constant 1 : i32
    %28 = arith.select %27, %c1_i32_9, %c16_i32 : i32
    %29 = vector.broadcast %28 : i32 to vector<1x256xi32>
    %30 = arith.remsi %10, %29 : vector<1x256xi32>
    %c0_i32_10 = arith.constant 0 : i32
    %31 = vector.broadcast %c0_i32_10 : i32 to vector<1x256xi32>
    %32 = arith.cmpi ne, %30, %31 : vector<1x256xi32>
    %c0_i32_11 = arith.constant 0 : i32
    %33 = vector.broadcast %c0_i32_11 : i32 to vector<1x256xi32>
    %34 = arith.cmpi slt, %30, %33 : vector<1x256xi32>
    %c0_i32_12 = arith.constant 0 : i32
    %35 = arith.cmpi slt, %28, %c0_i32_12 : i32
    %36 = vector.broadcast %35 : i1 to vector<1x256xi1>
    %37 = vector.broadcast %36 : vector<1x256xi1> to vector<1x256xi1>
    %38 = arith.xori %34, %37 : vector<1x256xi1>
    %39 = arith.andi %38, %32 : vector<1x256xi1>
    %40 = vector.broadcast %28 : i32 to vector<1x256xi32>
    %41 = arith.addi %30, %40 : vector<1x256xi32>
    %42 = arith.select %39, %41, %30 : vector<1x256xi1>, vector<1x256xi32>
    %c16_i32_13 = arith.constant 16 : i32
    %43 = vector.broadcast %c16_i32_13 : i32 to vector<1x256xi32>
    %44 = arith.cmpi sge, %26, %43 : vector<1x256xi32>
    %45 = arith.extui %44 : vector<1x256xi1> to vector<1x256xi32>
    %46 = arith.sitofp %45 : vector<1x256xi32> to vector<1x256xf32>
    %c240_i32 = arith.constant 240 : i32
    %47 = vector.broadcast %c240_i32 : i32 to vector<1x256xi32>
    %48 = arith.cmpi slt, %26, %47 : vector<1x256xi32>
    %49 = arith.extui %48 : vector<1x256xi1> to vector<1x256xi32>
    %50 = arith.sitofp %49 : vector<1x256xi32> to vector<1x256xf32>
    %c1_i32_14 = arith.constant 1 : i32
    %51 = vector.broadcast %c1_i32_14 : i32 to vector<1x256xi32>
    %52 = arith.cmpi sge, %42, %51 : vector<1x256xi32>
    %53 = arith.extui %52 : vector<1x256xi1> to vector<1x256xi32>
    %54 = arith.sitofp %53 : vector<1x256xi32> to vector<1x256xf32>
    %c15_i32 = arith.constant 15 : i32
    %55 = vector.broadcast %c15_i32 : i32 to vector<1x256xi32>
    %56 = arith.cmpi slt, %42, %55 : vector<1x256xi32>
    %57 = arith.extui %56 : vector<1x256xi1> to vector<1x256xi32>
    %58 = arith.sitofp %57 : vector<1x256xi32> to vector<1x256xf32>
    %59 = arith.mulf %46, %54 : vector<1x256xf32>
    %60 = arith.mulf %46, %58 : vector<1x256xf32>
    %61 = arith.mulf %50, %54 : vector<1x256xf32>
    %62 = arith.mulf %50, %58 : vector<1x256xf32>
    %cst_15 = arith.constant 0.000000e+00 : f32
    %63 = vector.broadcast %cst_15 : f32 to vector<8x256xf32>
    %c17_i32 = arith.constant 17 : i32
    %64 = tpu.dynamic_rotate %9 by %c17_i32 dim 1 : vector<8x256xf32>, i32 -> vector<8x256xf32>
    %65 = vector.broadcast %59 : vector<1x256xf32> to vector<8x256xf32>
    %66 = arith.mulf %64, %65 : vector<8x256xf32>
    %c0_16 = arith.constant 0 : index
    %c0_17 = arith.constant 0 : index
    %c0_18 = arith.constant 0 : index
    %67 = vector.load %arg3[%c0_16, %c0_17, %c0_18] : memref<9x8x8xbf16, #tpu.memory_space<vmem>>, vector<1x8x8xbf16>
    %68 = vector.shape_cast %67 : vector<1x8x8xbf16> to vector<8x8xbf16>
    %69 = arith.truncf %66 : vector<8x256xf32> to vector<8x256xbf16>
    %cst_19 = arith.constant dense<0.000000e+00> : vector<8x256xf32>
    %70 = tpu.matmul %68, %69, %cst_19 {dimension_numbers = #tpu.dot_dimension_numbers<[1], [0], [0], [1], [0, 0, 1, 1], [], []>} : vector<8x8xbf16>, vector<8x256xbf16>, vector<8x256xf32> -> vector<8x256xf32>
    %71 = arith.addf %63, %70 : vector<8x256xf32>
    %c16_i32_20 = arith.constant 16 : i32
    %72 = tpu.dynamic_rotate %9 by %c16_i32_20 dim 1 : vector<8x256xf32>, i32 -> vector<8x256xf32>
    %73 = vector.broadcast %46 : vector<1x256xf32> to vector<8x256xf32>
    %74 = arith.mulf %72, %73 : vector<8x256xf32>
    %c1 = arith.constant 1 : index
    %c0_21 = arith.constant 0 : index
    %c0_22 = arith.constant 0 : index
    %75 = vector.load %arg3[%c1, %c0_21, %c0_22] : memref<9x8x8xbf16, #tpu.memory_space<vmem>>, vector<1x8x8xbf16>
    %76 = vector.shape_cast %75 : vector<1x8x8xbf16> to vector<8x8xbf16>
    %77 = arith.truncf %74 : vector<8x256xf32> to vector<8x256xbf16>
    %cst_23 = arith.constant dense<0.000000e+00> : vector<8x256xf32>
    %78 = tpu.matmul %76, %77, %cst_23 {dimension_numbers = #tpu.dot_dimension_numbers<[1], [0], [0], [1], [0, 0, 1, 1], [], []>} : vector<8x8xbf16>, vector<8x256xbf16>, vector<8x256xf32> -> vector<8x256xf32>
    %79 = arith.addf %71, %78 : vector<8x256xf32>
    %c15_i32_24 = arith.constant 15 : i32
    %80 = tpu.dynamic_rotate %9 by %c15_i32_24 dim 1 : vector<8x256xf32>, i32 -> vector<8x256xf32>
    %81 = vector.broadcast %60 : vector<1x256xf32> to vector<8x256xf32>
    %82 = arith.mulf %80, %81 : vector<8x256xf32>
    %c2 = arith.constant 2 : index
    %c0_25 = arith.constant 0 : index
    %c0_26 = arith.constant 0 : index
    %83 = vector.load %arg3[%c2, %c0_25, %c0_26] : memref<9x8x8xbf16, #tpu.memory_space<vmem>>, vector<1x8x8xbf16>
    %84 = vector.shape_cast %83 : vector<1x8x8xbf16> to vector<8x8xbf16>
    %85 = arith.truncf %82 : vector<8x256xf32> to vector<8x256xbf16>
    %cst_27 = arith.constant dense<0.000000e+00> : vector<8x256xf32>
    %86 = tpu.matmul %84, %85, %cst_27 {dimension_numbers = #tpu.dot_dimension_numbers<[1], [0], [0], [1], [0, 0, 1, 1], [], []>} : vector<8x8xbf16>, vector<8x256xbf16>, vector<8x256xf32> -> vector<8x256xf32>
    %87 = arith.addf %79, %86 : vector<8x256xf32>
    %c1_i32_28 = arith.constant 1 : i32
    %88 = tpu.dynamic_rotate %9 by %c1_i32_28 dim 1 : vector<8x256xf32>, i32 -> vector<8x256xf32>
    %89 = vector.broadcast %54 : vector<1x256xf32> to vector<8x256xf32>
    %90 = arith.mulf %88, %89 : vector<8x256xf32>
    %c3 = arith.constant 3 : index
    %c0_29 = arith.constant 0 : index
    %c0_30 = arith.constant 0 : index
    %91 = vector.load %arg3[%c3, %c0_29, %c0_30] : memref<9x8x8xbf16, #tpu.memory_space<vmem>>, vector<1x8x8xbf16>
    %92 = vector.shape_cast %91 : vector<1x8x8xbf16> to vector<8x8xbf16>
    %93 = arith.truncf %90 : vector<8x256xf32> to vector<8x256xbf16>
    %cst_31 = arith.constant dense<0.000000e+00> : vector<8x256xf32>
    %94 = tpu.matmul %92, %93, %cst_31 {dimension_numbers = #tpu.dot_dimension_numbers<[1], [0], [0], [1], [0, 0, 1, 1], [], []>} : vector<8x8xbf16>, vector<8x256xbf16>, vector<8x256xf32> -> vector<8x256xf32>
    %95 = arith.addf %87, %94 : vector<8x256xf32>
    %c4 = arith.constant 4 : index
    %c0_32 = arith.constant 0 : index
    %c0_33 = arith.constant 0 : index
    %96 = vector.load %arg3[%c4, %c0_32, %c0_33] : memref<9x8x8xbf16, #tpu.memory_space<vmem>>, vector<1x8x8xbf16>
    %97 = vector.shape_cast %96 : vector<1x8x8xbf16> to vector<8x8xbf16>
    %98 = arith.truncf %9 : vector<8x256xf32> to vector<8x256xbf16>
    %cst_34 = arith.constant dense<0.000000e+00> : vector<8x256xf32>
    %99 = tpu.matmul %97, %98, %cst_34 {dimension_numbers = #tpu.dot_dimension_numbers<[1], [0], [0], [1], [0, 0, 1, 1], [], []>} : vector<8x8xbf16>, vector<8x256xbf16>, vector<8x256xf32> -> vector<8x256xf32>
    %100 = arith.addf %95, %99 : vector<8x256xf32>
    %c255_i32 = arith.constant 255 : i32
    %101 = tpu.dynamic_rotate %9 by %c255_i32 dim 1 : vector<8x256xf32>, i32 -> vector<8x256xf32>
    %102 = vector.broadcast %58 : vector<1x256xf32> to vector<8x256xf32>
    %103 = arith.mulf %101, %102 : vector<8x256xf32>
    %c5 = arith.constant 5 : index
    %c0_35 = arith.constant 0 : index
    %c0_36 = arith.constant 0 : index
    %104 = vector.load %arg3[%c5, %c0_35, %c0_36] : memref<9x8x8xbf16, #tpu.memory_space<vmem>>, vector<1x8x8xbf16>
    %105 = vector.shape_cast %104 : vector<1x8x8xbf16> to vector<8x8xbf16>
    %106 = arith.truncf %103 : vector<8x256xf32> to vector<8x256xbf16>
    %cst_37 = arith.constant dense<0.000000e+00> : vector<8x256xf32>
    %107 = tpu.matmul %105, %106, %cst_37 {dimension_numbers = #tpu.dot_dimension_numbers<[1], [0], [0], [1], [0, 0, 1, 1], [], []>} : vector<8x8xbf16>, vector<8x256xbf16>, vector<8x256xf32> -> vector<8x256xf32>
    %108 = arith.addf %100, %107 : vector<8x256xf32>
    %c241_i32 = arith.constant 241 : i32
    %109 = tpu.dynamic_rotate %9 by %c241_i32 dim 1 : vector<8x256xf32>, i32 -> vector<8x256xf32>
    %110 = vector.broadcast %61 : vector<1x256xf32> to vector<8x256xf32>
    %111 = arith.mulf %109, %110 : vector<8x256xf32>
    %c6 = arith.constant 6 : index
    %c0_38 = arith.constant 0 : index
    %c0_39 = arith.constant 0 : index
    %112 = vector.load %arg3[%c6, %c0_38, %c0_39] : memref<9x8x8xbf16, #tpu.memory_space<vmem>>, vector<1x8x8xbf16>
    %113 = vector.shape_cast %112 : vector<1x8x8xbf16> to vector<8x8xbf16>
    %114 = arith.truncf %111 : vector<8x256xf32> to vector<8x256xbf16>
    %cst_40 = arith.constant dense<0.000000e+00> : vector<8x256xf32>
    %115 = tpu.matmul %113, %114, %cst_40 {dimension_numbers = #tpu.dot_dimension_numbers<[1], [0], [0], [1], [0, 0, 1, 1], [], []>} : vector<8x8xbf16>, vector<8x256xbf16>, vector<8x256xf32> -> vector<8x256xf32>
    %116 = arith.addf %108, %115 : vector<8x256xf32>
    %c240_i32_41 = arith.constant 240 : i32
    %117 = tpu.dynamic_rotate %9 by %c240_i32_41 dim 1 : vector<8x256xf32>, i32 -> vector<8x256xf32>
    %118 = vector.broadcast %50 : vector<1x256xf32> to vector<8x256xf32>
    %119 = arith.mulf %117, %118 : vector<8x256xf32>
    %c7 = arith.constant 7 : index
    %c0_42 = arith.constant 0 : index
    %c0_43 = arith.constant 0 : index
    %120 = vector.load %arg3[%c7, %c0_42, %c0_43] : memref<9x8x8xbf16, #tpu.memory_space<vmem>>, vector<1x8x8xbf16>
    %121 = vector.shape_cast %120 : vector<1x8x8xbf16> to vector<8x8xbf16>
    %122 = arith.truncf %119 : vector<8x256xf32> to vector<8x256xbf16>
    %cst_44 = arith.constant dense<0.000000e+00> : vector<8x256xf32>
    %123 = tpu.matmul %121, %122, %cst_44 {dimension_numbers = #tpu.dot_dimension_numbers<[1], [0], [0], [1], [0, 0, 1, 1], [], []>} : vector<8x8xbf16>, vector<8x256xbf16>, vector<8x256xf32> -> vector<8x256xf32>
    %124 = arith.addf %116, %123 : vector<8x256xf32>
    %c239_i32 = arith.constant 239 : i32
    %125 = tpu.dynamic_rotate %9 by %c239_i32 dim 1 : vector<8x256xf32>, i32 -> vector<8x256xf32>
    %126 = vector.broadcast %62 : vector<1x256xf32> to vector<8x256xf32>
    %127 = arith.mulf %125, %126 : vector<8x256xf32>
    %c8 = arith.constant 8 : index
    %c0_45 = arith.constant 0 : index
    %c0_46 = arith.constant 0 : index
    %128 = vector.load %arg3[%c8, %c0_45, %c0_46] : memref<9x8x8xbf16, #tpu.memory_space<vmem>>, vector<1x8x8xbf16>
    %129 = vector.shape_cast %128 : vector<1x8x8xbf16> to vector<8x8xbf16>
    %130 = arith.truncf %127 : vector<8x256xf32> to vector<8x256xbf16>
    %cst_47 = arith.constant dense<0.000000e+00> : vector<8x256xf32>
    %131 = tpu.matmul %129, %130, %cst_47 {dimension_numbers = #tpu.dot_dimension_numbers<[1], [0], [0], [1], [0, 0, 1, 1], [], []>} : vector<8x8xbf16>, vector<8x256xbf16>, vector<8x256xf32> -> vector<8x256xf32>
    %132 = arith.addf %124, %131 : vector<8x256xf32>
    %c0_48 = arith.constant 0 : index
    %c0_49 = arith.constant 0 : index
    %133 = vector.load %arg4[%c0_48, %c0_49] : memref<8x8xbf16, #tpu.memory_space<vmem>>, vector<8x8xbf16>
    %c0_50 = arith.constant 0 : index
    %c0_51 = arith.constant 0 : index
    %134 = vector.load %arg7[%c0_50, %c0_51] : memref<8x256xf32, #tpu.memory_space<vmem>>, vector<8x256xf32>
    %135 = arith.truncf %134 : vector<8x256xf32> to vector<8x256xbf16>
    %cst_52 = arith.constant dense<0.000000e+00> : vector<8x256xf32>
    %136 = tpu.matmul %133, %135, %cst_52 {dimension_numbers = #tpu.dot_dimension_numbers<[1], [0], [0], [1], [0, 0, 1, 1], [], []>} : vector<8x8xbf16>, vector<8x256xbf16>, vector<8x256xf32> -> vector<8x256xf32>
    %c0_53 = arith.constant 0 : index
    %c0_54 = arith.constant 0 : index
    %137 = vector.load %arg5[%c0_53, %c0_54] : memref<8x1xf32, #tpu.memory_space<vmem>>, vector<8x1xf32>
    %138 = vector.broadcast %137 : vector<8x1xf32> to vector<8x256xf32>
    %139 = arith.addf %136, %138 : vector<8x256xf32>
    %140 = arith.addf %132, %139 : vector<8x256xf32>
    %c0_55 = arith.constant 0 : index
    %c0_56 = arith.constant 0 : index
    %141 = vector.load %arg8[%c0_55, %c0_56] : memref<8x256xf32, #tpu.memory_space<vmem>>, vector<8x256xf32>
    tpu.vector_store %arg8[%c0_55, %c0_56], %140 {strides = array<i32>} : memref<8x256xf32, #tpu.memory_space<vmem>>, vector<8x256xf32>,
    return
  }
  func.func @transform_0(%arg0: i32) -> (i32, i32) {
    %c0_i32 = arith.constant 0 : i32
    %c0_i32_0 = arith.constant 0 : i32
    %c0_i32_1 = arith.constant 0 : i32
    return %c0_i32, %c0_i32_0 : i32, i32
  }
  func.func @transform_1(%arg0: i32) -> (i32, i32) {
    %c0_i32 = arith.constant 0 : i32
    %c0_i32_0 = arith.constant 0 : i32
    %c0_i32_1 = arith.constant 0 : i32
    return %c0_i32, %c0_i32_0 : i32, i32
  }
  func.func @transform_2(%arg0: i32) -> (i32, i32, i32) {
    %c0_i32 = arith.constant 0 : i32
    %c0_i32_0 = arith.constant 0 : i32
    %c0_i32_1 = arith.constant 0 : i32
    %c0_i32_2 = arith.constant 0 : i32
    return %c0_i32, %c0_i32_0, %c0_i32_1 : i32, i32, i32
  }
  func.func @transform_3(%arg0: i32) -> (i32, i32) {
    %c0_i32 = arith.constant 0 : i32
    %c0_i32_0 = arith.constant 0 : i32
    %c0_i32_1 = arith.constant 0 : i32
    return %c0_i32, %c0_i32_0 : i32, i32
  }
  func.func @transform_4(%arg0: i32) -> (i32, i32) {
    %c0_i32 = arith.constant 0 : i32
    %c0_i32_0 = arith.constant 0 : i32
    %c0_i32_1 = arith.constant 0 : i32
    return %c0_i32, %c0_i32_0 : i32, i32
  }
  func.func @transform_5(%arg0: i32) -> (i32, i32) {
    %c0_i32 = arith.constant 0 : i32
    %c0_i32_0 = arith.constant 0 : i32
    return %c0_i32, %arg0 : i32, i32
  }
  func.func @transform_6(%arg0: i32) -> (i32, i32) {
    %c0_i32 = arith.constant 0 : i32
    %c0_i32_0 = arith.constant 0 : i32
    return %c0_i32, %arg0 : i32, i32
  }
  func.func @transform_7(%arg0: i32) -> (i32, i32) {
    %c0_i32 = arith.constant 0 : i32
    %c0_i32_0 = arith.constant 0 : i32
    return %c0_i32, %arg0 : i32, i32
  }
}

module attributes {stable_mosaic.version = 11 : i64} {
  func.func @stats_kernel(%arg0: i32, %arg1: memref<8x256xf32, #tpu.memory_space<vmem>>, %arg2: memref<1x8x1xf32, #tpu.memory_space<vmem>>, %arg3: memref<1x8x1xf32, #tpu.memory_space<vmem>>) attributes {dimension_semantics = [#tpu.dimension_semantics<parallel>], iteration_bounds = array<i64: 2>, scalar_prefetch = 0 : i64, scratch_operands = 0 : i64, tpu.core_type = #tpu.core_type<tc>, window_params = [{transform_indices = @transform_0, window_bounds = array<i64: 8, 256>}, {transform_indices = @transform_1, window_bounds = array<i64: 1, 8, 1>}, {transform_indices = @transform_2, window_bounds = array<i64: 1, 8, 1>}]} {
    %c0 = arith.constant 0 : index
    %c0_0 = arith.constant 0 : index
    %0 = vector.load %arg1[%c0, %c0_0] : memref<8x256xf32, #tpu.memory_space<vmem>>, vector<8x256xf32>
    %cst = arith.constant dense<0.000000e+00> : vector<8xf32>
    %1 = vector.multi_reduction <add>, %0, %cst [1] : vector<8x256xf32> to vector<8xf32>
    %2 = vector.shape_cast %1 : vector<8xf32> to vector<8x1xf32>
    %c0_1 = arith.constant 0 : index
    %c0_2 = arith.constant 0 : index
    %c0_3 = arith.constant 0 : index
    %3 = vector.load %arg2[%c0_1, %c0_2, %c0_3] : memref<1x8x1xf32, #tpu.memory_space<vmem>>, vector<1x8x1xf32>
    %4 = vector.shape_cast %3 : vector<1x8x1xf32> to vector<8x1xf32>
    %5 = vector.shape_cast %2 : vector<8x1xf32> to vector<1x8x1xf32>
    tpu.vector_store %arg2[%c0_1, %c0_2, %c0_3], %5 {strides = array<i32>} : memref<1x8x1xf32, #tpu.memory_space<vmem>>, vector<1x8x1xf32>,
    %6 = arith.mulf %0, %0 : vector<8x256xf32>
    %cst_4 = arith.constant dense<0.000000e+00> : vector<8xf32>
    %7 = vector.multi_reduction <add>, %6, %cst_4 [1] : vector<8x256xf32> to vector<8xf32>
    %8 = vector.shape_cast %7 : vector<8xf32> to vector<8x1xf32>
    %c0_5 = arith.constant 0 : index
    %c0_6 = arith.constant 0 : index
    %c0_7 = arith.constant 0 : index
    %9 = vector.load %arg3[%c0_5, %c0_6, %c0_7] : memref<1x8x1xf32, #tpu.memory_space<vmem>>, vector<1x8x1xf32>
    %10 = vector.shape_cast %9 : vector<1x8x1xf32> to vector<8x1xf32>
    %11 = vector.shape_cast %8 : vector<8x1xf32> to vector<1x8x1xf32>
    tpu.vector_store %arg3[%c0_5, %c0_6, %c0_7], %11 {strides = array<i32>} : memref<1x8x1xf32, #tpu.memory_space<vmem>>, vector<1x8x1xf32>,
    return
  }
  func.func @transform_0(%arg0: i32) -> (i32, i32) {
    %c0_i32 = arith.constant 0 : i32
    %c0_i32_0 = arith.constant 0 : i32
    return %c0_i32, %arg0 : i32, i32
  }
  func.func @transform_1(%arg0: i32) -> (i32, i32, i32) {
    %c0_i32 = arith.constant 0 : i32
    %c0_i32_0 = arith.constant 0 : i32
    %c0_i32_1 = arith.constant 0 : i32
    return %arg0, %c0_i32, %c0_i32_0 : i32, i32, i32
  }
  func.func @transform_2(%arg0: i32) -> (i32, i32, i32) {
    %c0_i32 = arith.constant 0 : i32
    %c0_i32_0 = arith.constant 0 : i32
    %c0_i32_1 = arith.constant 0 : i32
    return %arg0, %c0_i32, %c0_i32_0 : i32, i32, i32
  }
}

module attributes {stable_mosaic.version = 11 : i64} {
  func.func @conv_stage_kernel(%arg0: i32, %arg1: memref<8x1xf32, #tpu.memory_space<vmem>>, %arg2: memref<8x1xf32, #tpu.memory_space<vmem>>, %arg3: memref<9x8x8xbf16, #tpu.memory_space<vmem>>, %arg4: memref<8x256xf32, #tpu.memory_space<vmem>>, %arg5: memref<8x256xf32, #tpu.memory_space<vmem>>, %arg6: memref<1x8x1xf32, #tpu.memory_space<vmem>>, %arg7: memref<1x8x1xf32, #tpu.memory_space<vmem>>) attributes {dimension_semantics = [#tpu.dimension_semantics<parallel>], iteration_bounds = array<i64: 2>, scalar_prefetch = 0 : i64, scratch_operands = 0 : i64, tpu.core_type = #tpu.core_type<tc>, window_params = [{pipeline_mode = #tpu.pipeline_mode<synchronous>, transform_indices = @transform_0, window_bounds = array<i64: 8, 1>}, {pipeline_mode = #tpu.pipeline_mode<synchronous>, transform_indices = @transform_1, window_bounds = array<i64: 8, 1>}, {pipeline_mode = #tpu.pipeline_mode<synchronous>, transform_indices = @transform_2, window_bounds = array<i64: 9, 8, 8>}, {transform_indices = @transform_3, window_bounds = array<i64: 8, 256>}, {transform_indices = @transform_4, window_bounds = array<i64: 8, 256>}, {transform_indices = @transform_5, window_bounds = array<i64: 1, 8, 1>}, {transform_indices = @transform_6, window_bounds = array<i64: 1, 8, 1>}]} {
    %c0 = arith.constant 0 : index
    %c0_0 = arith.constant 0 : index
    %0 = vector.load %arg4[%c0, %c0_0] : memref<8x256xf32, #tpu.memory_space<vmem>>, vector<8x256xf32>
    %c0_1 = arith.constant 0 : index
    %c0_2 = arith.constant 0 : index
    %1 = vector.load %arg1[%c0_1, %c0_2] : memref<8x1xf32, #tpu.memory_space<vmem>>, vector<8x1xf32>
    %c0_3 = arith.constant 0 : index
    %c0_4 = arith.constant 0 : index
    %2 = vector.load %arg2[%c0_3, %c0_4] : memref<8x1xf32, #tpu.memory_space<vmem>>, vector<8x1xf32>
    %3 = vector.broadcast %1 : vector<8x1xf32> to vector<8x256xf32>
    %4 = arith.mulf %0, %3 : vector<8x256xf32>
    %5 = vector.broadcast %2 : vector<8x1xf32> to vector<8x256xf32>
    %6 = arith.addf %4, %5 : vector<8x256xf32>
    %cst = arith.constant 1.000000e-01 : f32
    %7 = vector.broadcast %cst : f32 to vector<8x256xf32>
    %8 = arith.mulf %7, %6 : vector<8x256xf32>
    %9 = arith.maximumf %6, %8 : vector<8x256xf32>
    %10 = tpu.iota {dimensions = array<i32: 1>} : vector<1x256xi32>
    %c256_i32 = arith.constant 256 : i32
    %c0_i32 = arith.constant 0 : i32
    %11 = arith.cmpi eq, %c256_i32, %c0_i32 : i32
    %c1_i32 = arith.constant 1 : i32
    %12 = arith.select %11, %c1_i32, %c256_i32 : i32
    %13 = vector.broadcast %12 : i32 to vector<1x256xi32>
    %14 = arith.remsi %10, %13 : vector<1x256xi32>
    %c0_i32_5 = arith.constant 0 : i32
    %15 = vector.broadcast %c0_i32_5 : i32 to vector<1x256xi32>
    %16 = arith.cmpi ne, %14, %15 : vector<1x256xi32>
    %c0_i32_6 = arith.constant 0 : i32
    %17 = vector.broadcast %c0_i32_6 : i32 to vector<1x256xi32>
    %18 = arith.cmpi slt, %14, %17 : vector<1x256xi32>
    %c0_i32_7 = arith.constant 0 : i32
    %19 = arith.cmpi slt, %12, %c0_i32_7 : i32
    %20 = vector.broadcast %19 : i1 to vector<1x256xi1>
    %21 = vector.broadcast %20 : vector<1x256xi1> to vector<1x256xi1>
    %22 = arith.xori %18, %21 : vector<1x256xi1>
    %23 = arith.andi %22, %16 : vector<1x256xi1>
    %24 = vector.broadcast %12 : i32 to vector<1x256xi32>
    %25 = arith.addi %14, %24 : vector<1x256xi32>
    %26 = arith.select %23, %25, %14 : vector<1x256xi1>, vector<1x256xi32>
    %c16_i32 = arith.constant 16 : i32
    %c0_i32_8 = arith.constant 0 : i32
    %27 = arith.cmpi eq, %c16_i32, %c0_i32_8 : i32
    %c1_i32_9 = arith.constant 1 : i32
    %28 = arith.select %27, %c1_i32_9, %c16_i32 : i32
    %29 = vector.broadcast %28 : i32 to vector<1x256xi32>
    %30 = arith.remsi %10, %29 : vector<1x256xi32>
    %c0_i32_10 = arith.constant 0 : i32
    %31 = vector.broadcast %c0_i32_10 : i32 to vector<1x256xi32>
    %32 = arith.cmpi ne, %30, %31 : vector<1x256xi32>
    %c0_i32_11 = arith.constant 0 : i32
    %33 = vector.broadcast %c0_i32_11 : i32 to vector<1x256xi32>
    %34 = arith.cmpi slt, %30, %33 : vector<1x256xi32>
    %c0_i32_12 = arith.constant 0 : i32
    %35 = arith.cmpi slt, %28, %c0_i32_12 : i32
    %36 = vector.broadcast %35 : i1 to vector<1x256xi1>
    %37 = vector.broadcast %36 : vector<1x256xi1> to vector<1x256xi1>
    %38 = arith.xori %34, %37 : vector<1x256xi1>
    %39 = arith.andi %38, %32 : vector<1x256xi1>
    %40 = vector.broadcast %28 : i32 to vector<1x256xi32>
    %41 = arith.addi %30, %40 : vector<1x256xi32>
    %42 = arith.select %39, %41, %30 : vector<1x256xi1>, vector<1x256xi32>
    %c16_i32_13 = arith.constant 16 : i32
    %43 = vector.broadcast %c16_i32_13 : i32 to vector<1x256xi32>
    %44 = arith.cmpi sge, %26, %43 : vector<1x256xi32>
    %45 = arith.extui %44 : vector<1x256xi1> to vector<1x256xi32>
    %46 = arith.sitofp %45 : vector<1x256xi32> to vector<1x256xf32>
    %c240_i32 = arith.constant 240 : i32
    %47 = vector.broadcast %c240_i32 : i32 to vector<1x256xi32>
    %48 = arith.cmpi slt, %26, %47 : vector<1x256xi32>
    %49 = arith.extui %48 : vector<1x256xi1> to vector<1x256xi32>
    %50 = arith.sitofp %49 : vector<1x256xi32> to vector<1x256xf32>
    %c1_i32_14 = arith.constant 1 : i32
    %51 = vector.broadcast %c1_i32_14 : i32 to vector<1x256xi32>
    %52 = arith.cmpi sge, %42, %51 : vector<1x256xi32>
    %53 = arith.extui %52 : vector<1x256xi1> to vector<1x256xi32>
    %54 = arith.sitofp %53 : vector<1x256xi32> to vector<1x256xf32>
    %c15_i32 = arith.constant 15 : i32
    %55 = vector.broadcast %c15_i32 : i32 to vector<1x256xi32>
    %56 = arith.cmpi slt, %42, %55 : vector<1x256xi32>
    %57 = arith.extui %56 : vector<1x256xi1> to vector<1x256xi32>
    %58 = arith.sitofp %57 : vector<1x256xi32> to vector<1x256xf32>
    %59 = arith.mulf %46, %54 : vector<1x256xf32>
    %60 = arith.mulf %46, %58 : vector<1x256xf32>
    %61 = arith.mulf %50, %54 : vector<1x256xf32>
    %62 = arith.mulf %50, %58 : vector<1x256xf32>
    %cst_15 = arith.constant 0.000000e+00 : f32
    %63 = vector.broadcast %cst_15 : f32 to vector<8x256xf32>
    %c17_i32 = arith.constant 17 : i32
    %64 = tpu.dynamic_rotate %9 by %c17_i32 dim 1 : vector<8x256xf32>, i32 -> vector<8x256xf32>
    %65 = vector.broadcast %59 : vector<1x256xf32> to vector<8x256xf32>
    %66 = arith.mulf %64, %65 : vector<8x256xf32>
    %c0_16 = arith.constant 0 : index
    %c0_17 = arith.constant 0 : index
    %c0_18 = arith.constant 0 : index
    %67 = vector.load %arg3[%c0_16, %c0_17, %c0_18] : memref<9x8x8xbf16, #tpu.memory_space<vmem>>, vector<1x8x8xbf16>
    %68 = vector.shape_cast %67 : vector<1x8x8xbf16> to vector<8x8xbf16>
    %69 = arith.truncf %66 : vector<8x256xf32> to vector<8x256xbf16>
    %cst_19 = arith.constant dense<0.000000e+00> : vector<8x256xf32>
    %70 = tpu.matmul %68, %69, %cst_19 {dimension_numbers = #tpu.dot_dimension_numbers<[1], [0], [0], [1], [0, 0, 1, 1], [], []>} : vector<8x8xbf16>, vector<8x256xbf16>, vector<8x256xf32> -> vector<8x256xf32>
    %71 = arith.addf %63, %70 : vector<8x256xf32>
    %c16_i32_20 = arith.constant 16 : i32
    %72 = tpu.dynamic_rotate %9 by %c16_i32_20 dim 1 : vector<8x256xf32>, i32 -> vector<8x256xf32>
    %73 = vector.broadcast %46 : vector<1x256xf32> to vector<8x256xf32>
    %74 = arith.mulf %72, %73 : vector<8x256xf32>
    %c1 = arith.constant 1 : index
    %c0_21 = arith.constant 0 : index
    %c0_22 = arith.constant 0 : index
    %75 = vector.load %arg3[%c1, %c0_21, %c0_22] : memref<9x8x8xbf16, #tpu.memory_space<vmem>>, vector<1x8x8xbf16>
    %76 = vector.shape_cast %75 : vector<1x8x8xbf16> to vector<8x8xbf16>
    %77 = arith.truncf %74 : vector<8x256xf32> to vector<8x256xbf16>
    %cst_23 = arith.constant dense<0.000000e+00> : vector<8x256xf32>
    %78 = tpu.matmul %76, %77, %cst_23 {dimension_numbers = #tpu.dot_dimension_numbers<[1], [0], [0], [1], [0, 0, 1, 1], [], []>} : vector<8x8xbf16>, vector<8x256xbf16>, vector<8x256xf32> -> vector<8x256xf32>
    %79 = arith.addf %71, %78 : vector<8x256xf32>
    %c15_i32_24 = arith.constant 15 : i32
    %80 = tpu.dynamic_rotate %9 by %c15_i32_24 dim 1 : vector<8x256xf32>, i32 -> vector<8x256xf32>
    %81 = vector.broadcast %60 : vector<1x256xf32> to vector<8x256xf32>
    %82 = arith.mulf %80, %81 : vector<8x256xf32>
    %c2 = arith.constant 2 : index
    %c0_25 = arith.constant 0 : index
    %c0_26 = arith.constant 0 : index
    %83 = vector.load %arg3[%c2, %c0_25, %c0_26] : memref<9x8x8xbf16, #tpu.memory_space<vmem>>, vector<1x8x8xbf16>
    %84 = vector.shape_cast %83 : vector<1x8x8xbf16> to vector<8x8xbf16>
    %85 = arith.truncf %82 : vector<8x256xf32> to vector<8x256xbf16>
    %cst_27 = arith.constant dense<0.000000e+00> : vector<8x256xf32>
    %86 = tpu.matmul %84, %85, %cst_27 {dimension_numbers = #tpu.dot_dimension_numbers<[1], [0], [0], [1], [0, 0, 1, 1], [], []>} : vector<8x8xbf16>, vector<8x256xbf16>, vector<8x256xf32> -> vector<8x256xf32>
    %87 = arith.addf %79, %86 : vector<8x256xf32>
    %c1_i32_28 = arith.constant 1 : i32
    %88 = tpu.dynamic_rotate %9 by %c1_i32_28 dim 1 : vector<8x256xf32>, i32 -> vector<8x256xf32>
    %89 = vector.broadcast %54 : vector<1x256xf32> to vector<8x256xf32>
    %90 = arith.mulf %88, %89 : vector<8x256xf32>
    %c3 = arith.constant 3 : index
    %c0_29 = arith.constant 0 : index
    %c0_30 = arith.constant 0 : index
    %91 = vector.load %arg3[%c3, %c0_29, %c0_30] : memref<9x8x8xbf16, #tpu.memory_space<vmem>>, vector<1x8x8xbf16>
    %92 = vector.shape_cast %91 : vector<1x8x8xbf16> to vector<8x8xbf16>
    %93 = arith.truncf %90 : vector<8x256xf32> to vector<8x256xbf16>
    %cst_31 = arith.constant dense<0.000000e+00> : vector<8x256xf32>
    %94 = tpu.matmul %92, %93, %cst_31 {dimension_numbers = #tpu.dot_dimension_numbers<[1], [0], [0], [1], [0, 0, 1, 1], [], []>} : vector<8x8xbf16>, vector<8x256xbf16>, vector<8x256xf32> -> vector<8x256xf32>
    %95 = arith.addf %87, %94 : vector<8x256xf32>
    %c4 = arith.constant 4 : index
    %c0_32 = arith.constant 0 : index
    %c0_33 = arith.constant 0 : index
    %96 = vector.load %arg3[%c4, %c0_32, %c0_33] : memref<9x8x8xbf16, #tpu.memory_space<vmem>>, vector<1x8x8xbf16>
    %97 = vector.shape_cast %96 : vector<1x8x8xbf16> to vector<8x8xbf16>
    %98 = arith.truncf %9 : vector<8x256xf32> to vector<8x256xbf16>
    %cst_34 = arith.constant dense<0.000000e+00> : vector<8x256xf32>
    %99 = tpu.matmul %97, %98, %cst_34 {dimension_numbers = #tpu.dot_dimension_numbers<[1], [0], [0], [1], [0, 0, 1, 1], [], []>} : vector<8x8xbf16>, vector<8x256xbf16>, vector<8x256xf32> -> vector<8x256xf32>
    %100 = arith.addf %95, %99 : vector<8x256xf32>
    %c255_i32 = arith.constant 255 : i32
    %101 = tpu.dynamic_rotate %9 by %c255_i32 dim 1 : vector<8x256xf32>, i32 -> vector<8x256xf32>
    %102 = vector.broadcast %58 : vector<1x256xf32> to vector<8x256xf32>
    %103 = arith.mulf %101, %102 : vector<8x256xf32>
    %c5 = arith.constant 5 : index
    %c0_35 = arith.constant 0 : index
    %c0_36 = arith.constant 0 : index
    %104 = vector.load %arg3[%c5, %c0_35, %c0_36] : memref<9x8x8xbf16, #tpu.memory_space<vmem>>, vector<1x8x8xbf16>
    %105 = vector.shape_cast %104 : vector<1x8x8xbf16> to vector<8x8xbf16>
    %106 = arith.truncf %103 : vector<8x256xf32> to vector<8x256xbf16>
    %cst_37 = arith.constant dense<0.000000e+00> : vector<8x256xf32>
    %107 = tpu.matmul %105, %106, %cst_37 {dimension_numbers = #tpu.dot_dimension_numbers<[1], [0], [0], [1], [0, 0, 1, 1], [], []>} : vector<8x8xbf16>, vector<8x256xbf16>, vector<8x256xf32> -> vector<8x256xf32>
    %108 = arith.addf %100, %107 : vector<8x256xf32>
    %c241_i32 = arith.constant 241 : i32
    %109 = tpu.dynamic_rotate %9 by %c241_i32 dim 1 : vector<8x256xf32>, i32 -> vector<8x256xf32>
    %110 = vector.broadcast %61 : vector<1x256xf32> to vector<8x256xf32>
    %111 = arith.mulf %109, %110 : vector<8x256xf32>
    %c6 = arith.constant 6 : index
    %c0_38 = arith.constant 0 : index
    %c0_39 = arith.constant 0 : index
    %112 = vector.load %arg3[%c6, %c0_38, %c0_39] : memref<9x8x8xbf16, #tpu.memory_space<vmem>>, vector<1x8x8xbf16>
    %113 = vector.shape_cast %112 : vector<1x8x8xbf16> to vector<8x8xbf16>
    %114 = arith.truncf %111 : vector<8x256xf32> to vector<8x256xbf16>
    %cst_40 = arith.constant dense<0.000000e+00> : vector<8x256xf32>
    %115 = tpu.matmul %113, %114, %cst_40 {dimension_numbers = #tpu.dot_dimension_numbers<[1], [0], [0], [1], [0, 0, 1, 1], [], []>} : vector<8x8xbf16>, vector<8x256xbf16>, vector<8x256xf32> -> vector<8x256xf32>
    %116 = arith.addf %108, %115 : vector<8x256xf32>
    %c240_i32_41 = arith.constant 240 : i32
    %117 = tpu.dynamic_rotate %9 by %c240_i32_41 dim 1 : vector<8x256xf32>, i32 -> vector<8x256xf32>
    %118 = vector.broadcast %50 : vector<1x256xf32> to vector<8x256xf32>
    %119 = arith.mulf %117, %118 : vector<8x256xf32>
    %c7 = arith.constant 7 : index
    %c0_42 = arith.constant 0 : index
    %c0_43 = arith.constant 0 : index
    %120 = vector.load %arg3[%c7, %c0_42, %c0_43] : memref<9x8x8xbf16, #tpu.memory_space<vmem>>, vector<1x8x8xbf16>
    %121 = vector.shape_cast %120 : vector<1x8x8xbf16> to vector<8x8xbf16>
    %122 = arith.truncf %119 : vector<8x256xf32> to vector<8x256xbf16>
    %cst_44 = arith.constant dense<0.000000e+00> : vector<8x256xf32>
    %123 = tpu.matmul %121, %122, %cst_44 {dimension_numbers = #tpu.dot_dimension_numbers<[1], [0], [0], [1], [0, 0, 1, 1], [], []>} : vector<8x8xbf16>, vector<8x256xbf16>, vector<8x256xf32> -> vector<8x256xf32>
    %124 = arith.addf %116, %123 : vector<8x256xf32>
    %c239_i32 = arith.constant 239 : i32
    %125 = tpu.dynamic_rotate %9 by %c239_i32 dim 1 : vector<8x256xf32>, i32 -> vector<8x256xf32>
    %126 = vector.broadcast %62 : vector<1x256xf32> to vector<8x256xf32>
    %127 = arith.mulf %125, %126 : vector<8x256xf32>
    %c8 = arith.constant 8 : index
    %c0_45 = arith.constant 0 : index
    %c0_46 = arith.constant 0 : index
    %128 = vector.load %arg3[%c8, %c0_45, %c0_46] : memref<9x8x8xbf16, #tpu.memory_space<vmem>>, vector<1x8x8xbf16>
    %129 = vector.shape_cast %128 : vector<1x8x8xbf16> to vector<8x8xbf16>
    %130 = arith.truncf %127 : vector<8x256xf32> to vector<8x256xbf16>
    %cst_47 = arith.constant dense<0.000000e+00> : vector<8x256xf32>
    %131 = tpu.matmul %129, %130, %cst_47 {dimension_numbers = #tpu.dot_dimension_numbers<[1], [0], [0], [1], [0, 0, 1, 1], [], []>} : vector<8x8xbf16>, vector<8x256xbf16>, vector<8x256xf32> -> vector<8x256xf32>
    %132 = arith.addf %124, %131 : vector<8x256xf32>
    %cst_48 = arith.constant dense<0.000000e+00> : vector<8xf32>
    %133 = vector.multi_reduction <add>, %132, %cst_48 [1] : vector<8x256xf32> to vector<8xf32>
    %134 = vector.shape_cast %133 : vector<8xf32> to vector<8x1xf32>
    %c0_49 = arith.constant 0 : index
    %c0_50 = arith.constant 0 : index
    %c0_51 = arith.constant 0 : index
    %135 = vector.load %arg6[%c0_49, %c0_50, %c0_51] : memref<1x8x1xf32, #tpu.memory_space<vmem>>, vector<1x8x1xf32>
    %136 = vector.shape_cast %135 : vector<1x8x1xf32> to vector<8x1xf32>
    %137 = vector.shape_cast %134 : vector<8x1xf32> to vector<1x8x1xf32>
    tpu.vector_store %arg6[%c0_49, %c0_50, %c0_51], %137 {strides = array<i32>} : memref<1x8x1xf32, #tpu.memory_space<vmem>>, vector<1x8x1xf32>,
    %138 = arith.mulf %132, %132 : vector<8x256xf32>
    %cst_52 = arith.constant dense<0.000000e+00> : vector<8xf32>
    %139 = vector.multi_reduction <add>, %138, %cst_52 [1] : vector<8x256xf32> to vector<8xf32>
    %140 = vector.shape_cast %139 : vector<8xf32> to vector<8x1xf32>
    %c0_53 = arith.constant 0 : index
    %c0_54 = arith.constant 0 : index
    %c0_55 = arith.constant 0 : index
    %141 = vector.load %arg7[%c0_53, %c0_54, %c0_55] : memref<1x8x1xf32, #tpu.memory_space<vmem>>, vector<1x8x1xf32>
    %142 = vector.shape_cast %141 : vector<1x8x1xf32> to vector<8x1xf32>
    %143 = vector.shape_cast %140 : vector<8x1xf32> to vector<1x8x1xf32>
    tpu.vector_store %arg7[%c0_53, %c0_54, %c0_55], %143 {strides = array<i32>} : memref<1x8x1xf32, #tpu.memory_space<vmem>>, vector<1x8x1xf32>,
    %c0_56 = arith.constant 0 : index
    %c0_57 = arith.constant 0 : index
    %144 = vector.load %arg5[%c0_56, %c0_57] : memref<8x256xf32, #tpu.memory_space<vmem>>, vector<8x256xf32>
    tpu.vector_store %arg5[%c0_56, %c0_57], %132 {strides = array<i32>} : memref<8x256xf32, #tpu.memory_space<vmem>>, vector<8x256xf32>,
    return
  }
  func.func @transform_0(%arg0: i32) -> (i32, i32) {
    %c0_i32 = arith.constant 0 : i32
    %c0_i32_0 = arith.constant 0 : i32
    %c0_i32_1 = arith.constant 0 : i32
    return %c0_i32, %c0_i32_0 : i32, i32
  }
  func.func @transform_1(%arg0: i32) -> (i32, i32) {
    %c0_i32 = arith.constant 0 : i32
    %c0_i32_0 = arith.constant 0 : i32
    %c0_i32_1 = arith.constant 0 : i32
    return %c0_i32, %c0_i32_0 : i32, i32
  }
  func.func @transform_2(%arg0: i32) -> (i32, i32, i32) {
    %c0_i32 = arith.constant 0 : i32
    %c0_i32_0 = arith.constant 0 : i32
    %c0_i32_1 = arith.constant 0 : i32
    %c0_i32_2 = arith.constant 0 : i32
    return %c0_i32, %c0_i32_0, %c0_i32_1 : i32, i32, i32
  }
  func.func @transform_3(%arg0: i32) -> (i32, i32) {
    %c0_i32 = arith.constant 0 : i32
    %c0_i32_0 = arith.constant 0 : i32
    return %c0_i32, %arg0 : i32, i32
  }
  func.func @transform_4(%arg0: i32) -> (i32, i32) {
    %c0_i32 = arith.constant 0 : i32
    %c0_i32_0 = arith.constant 0 : i32
    return %c0_i32, %arg0 : i32, i32
  }
  func.func @transform_5(%arg0: i32) -> (i32, i32, i32) {
    %c0_i32 = arith.constant 0 : i32
    %c0_i32_0 = arith.constant 0 : i32
    %c0_i32_1 = arith.constant 0 : i32
    return %arg0, %c0_i32, %c0_i32_0 : i32, i32, i32
  }
  func.func @transform_6(%arg0: i32) -> (i32, i32, i32) {
    %c0_i32 = arith.constant 0 : i32
    %c0_i32_0 = arith.constant 0 : i32
    %c0_i32_1 = arith.constant 0 : i32
    return %arg0, %c0_i32, %c0_i32_0 : i32, i32, i32
  }
}

</mosaic_0001>

<llo_original>
// kernel: resblock_forward.4
$region0: #{resblock_forward.4}
  #allocation0 [shape = 'u32[]', space=smem, size = 0x4, offset = 0x4, fixed_abs, tag = 'smem constant byte address 0x4 - core index']
  #allocation1 [shape = 'u32[144,128]{1,0:T(1,128)}', space=vmem, size = 0x12000, scoped, tag = 'internal scratch']
  %s0 = inlined_call_operand.vmem [shape: f32[8,512], index: 0, kind: input, shape index: {}]
  %s1 = inlined_call_operand.vmem [shape: f32[2,8,1], index: 1, kind: output, shape index: {0}]
  %s2 = inlined_call_operand.vmem [shape: f32[2,8,1], index: 2, kind: output, shape index: {1}]
  %3 = xla_tuple %s1, %s2
  %s4 = sld [smem:[#allocation0]]
  $region45: #{resblock_forward.4} parent=0
    _
  %s6 = ssub.s32 1, %s4
  %s7 = scalar_select 0, %s6, %s4
  loop: start=0, step=1, limit=4
  $region2: #{resblock_forward.4} parent=0 // loop_pre_header
    _
  $region3: #{resblock_forward.4} parent=0 // loop_header
    %s9 = sphi 0, %s13
    %p10 = scmp.ge.s32.totalorder %s9, 4
    %s19 = sphi 0, %s21
    %s22 = sphi 0, %s19
    %s23 = sphi 0, %s22
    %s39 = sphi 0, %s23
    %s45 = sphi 0, %s47
    %s48 = sphi 0, %s45
    %s49 = sphi 0, %s48
    %s65 = sphi 0, %s49
    %s71 = sphi 0, %s73
    %s74 = sphi 0, %s71
    %s75 = sphi 0, %s74
    %s91 = sphi 0, %s75
  $region4: #{resblock_forward.4} parent=0 // loop_header_branch
    %12 = sbr.rel (%p10) target = $region8
  $region5: #{resblock_forward.4} parent=0 // loop_body
    %s14 = ssub.s32 %s9, 1
    %s15 = ssub.s32 %s9, 2
    %s16 = sadd.s32 %s9, 1
    %s17 = ssub.s32 %s9, %s16
    %p18 = scmp.eq.s32.totalorder %s17, 0
    %s20 = sadd.s32 %s19, 1
    %s21 = scalar_select %p18, %s19, %s20
    %p24 = pneg %p18
    %p25 = scmp.eq.s32.totalorder %s9, 1
    %p26 = por %p24, %p25
    %p27 = scmp.ne.s32.totalorder %s19, %s22
    %p28 = scmp.eq.s32.totalorder %s9, 0
    %p29 = por %p27, %p28
    %p30 = scmp.ne.s32.totalorder %s19, %s22
    %p31 = scmp.eq.s32.totalorder %s14, 1
    %p32 = por %p30, %p31
    %p33 = scmp.ne.s32.totalorder %s22, %s23
    %p34 = scmp.eq.s32.totalorder %s14, 0
    %p35 = por %p33, %p34
    %p36 = scmp.ne.s32.totalorder %s22, %s23
    %p37 = scmp.eq.s32.totalorder %s15, 1
    %p38 = por %p36, %p37
    %p40 = scmp.ne.s32.totalorder %s23, %s39
    %p41 = scmp.eq.s32.totalorder %s15, 0
    %p42 = por %p40, %p41
    %s43 = ssub.s32 %s9, %s16
    %p44 = scmp.eq.s32.totalorder %s43, 0
    %s46 = sadd.s32 %s45, 1
    %s47 = scalar_select %p44, %s45, %s46
    %p50 = pneg %p44
    %p51 = scmp.eq.s32.totalorder %s9, 1
    %p52 = por %p50, %p51
    %p53 = scmp.ne.s32.totalorder %s45, %s48
    %p54 = scmp.eq.s32.totalorder %s9, 0
    %p55 = por %p53, %p54
    %p56 = scmp.ne.s32.totalorder %s45, %s48
    %p57 = scmp.eq.s32.totalorder %s14, 1
    %p58 = por %p56, %p57
    %p59 = scmp.ne.s32.totalorder %s48, %s49
    %p60 = scmp.eq.s32.totalorder %s14, 0
    %p61 = por %p59, %p60
    %p62 = scmp.ne.s32.totalorder %s48, %s49
    %p63 = scmp.eq.s32.totalorder %s15, 1
    %p64 = por %p62, %p63
    %p66 = scmp.ne.s32.totalorder %s49, %s65
    %p67 = scmp.eq.s32.totalorder %s15, 0
    %p68 = por %p66, %p67
    %s69 = ssub.s32 %s9, %s16
    %p70 = scmp.eq.s32.totalorder %s69, 0
    %s72 = sadd.s32 %s71, 1
    %s73 = scalar_select %p70, %s71, %s72
    %p76 = pneg %p70
    %p77 = scmp.eq.s32.totalorder %s9, 1
    %p78 = por %p76, %p77
    %p79 = scmp.ne.s32.totalorder %s71, %s74
    %p80 = scmp.eq.s32.totalorder %s9, 0
    %p81 = por %p79, %p80
    %p82 = scmp.ne.s32.totalorder %s71, %s74
    %p83 = scmp.eq.s32.totalorder %s14, 1
    %p84 = por %p82, %p83
    %p85 = scmp.ne.s32.totalorder %s74, %s75
    %p86 = scmp.eq.s32.totalorder %s14, 0
    %p87 = por %p85, %p86
    %p88 = scmp.ne.s32.totalorder %s74, %s75
    %p89 = scmp.eq.s32.totalorder %s15, 1
    %p90 = por %p88, %p89
    %p92 = scmp.ne.s32.totalorder %s75, %s91
    %p93 = scmp.eq.s32.totalorder %s15, 0
    %p94 = por %p92, %p93
    %p95 = scmp.le.s32.totalorder 1, %s9
    %p96 = scmp.lt.s32.totalorder %s9, 3
    %p97 = pnand %p95, %p96
    %p98 = pneg %p97
    // Predicated region
    $region9: #{resblock_forward.4} parent=5 // pred_check
      _
    $region10: #{resblock_forward.4} parent=5 // pred_check_branch
      %100 = sbr.rel (%p97) target = $region12
    $region11: #{resblock_forward.4} parent=5 // pred_region
      %s101 = ssub.s32 %s9, 1
    $region12: #{resblock_forward.4} parent=5 // pred_fallthru
      _
    %p102 = scmp.lt.s32.totalorder %s9, 2
    // Predicated region
    $region13: #{resblock_forward.4} parent=5 // pred_check
      %p103 = pneg %p102
    $region14: #{resblock_forward.4} parent=5 // pred_check_branch
      %105 = sbr.rel (%p103) target = $region16
    $region15: #{resblock_forward.4} parent=5 // pred_region
      // Predicated region
      $region17: #{resblock_forward.4} parent=15 // pred_check
        %p106 = pneg %p29
      $region18: #{resblock_forward.4} parent=15 // pred_check_branch
        %108 = sbr.rel (%p106) target = $region20
      $region19: #{resblock_forward.4} parent=15 // pred_region
        %s109 = smul.u32 2, %s9
        %p110 = scmp.lt.s32.totalorder %s109, 3
        %s111 = scalar_select %p110, %s109, 3
        %s112 = smul.addr %s111, 8
        %s113 = scalar_lea.vmem %s0, %s112
        %s114 = smul.u32 2, %s9
      $region20: #{resblock_forward.4} parent=15 // pred_fallthru
        _
    $region16: #{resblock_forward.4} parent=5 // pred_fallthru
      _
    %p115 = scmp.le.s32.totalorder 1, %s9
    %p116 = scmp.lt.s32.totalorder %s9, 3
    %p117 = pnand %p115, %p116
    %p118 = pneg %p117
    // Predicated region
    $region21: #{resblock_forward.4} parent=5 // pred_check
      _
    $region22: #{resblock_forward.4} parent=5 // pred_check_branch
      %120 = sbr.rel (%p117) target = $region24
    $region23: #{resblock_forward.4} parent=5 // pred_region
      %s121 = ssub.s32 %s9, 1
      %s122 = smul.u32 2, %s14
      %p123 = scmp.lt.s32.totalorder %s122, 3
      %s124 = scalar_select %p123, %s122, 3
      %s125 = smul.addr %s124, 8
      %s126 = scalar_lea.vmem %s0, %s125
      %p127 = pneg %p35
      %p128 = pneg %p32
      %p129 = pneg %p61
      %p130 = pneg %p58
      %p131 = scmp.lt.s32.totalorder %s14, 1
      %s132 = scalar_select %p131, %s14, 1
      %s133 = smul.addr %s132, 8
      %s134 = scalar_lea.vmem %s1, %s133
      %p135 = pneg %p87
      %p136 = pneg %p84
      %p137 = scmp.lt.s32.totalorder %s14, 1
      %s138 = scalar_select %p137, %s14, 1
      %s139 = smul.addr %s138, 8
      %s140 = scalar_lea.vmem %s2, %s139
      %s141 = smul.u32 2, %s14
      %p142 = scmp.lt.s32.totalorder %s141, 3
      %s143 = scalar_select %p142, %s141, 3
      %s144 = smul.addr %s143, 8
      %s145 = scalar_lea.vmem %s0, %s144
      %s146 = smul.u32 2, %s14
      %p147 = scmp.lt.s32.totalorder %s14, 1
      %s148 = scalar_select %p147, %s14, 1
      %s149 = smul.addr %s148, 8
      %s150 = scalar_lea.vmem %s1, %s149
      %p151 = scmp.lt.s32.totalorder %s14, 1
      %s152 = scalar_select %p151, %s14, 1
      %s153 = smul.addr %s152, 8
      %s154 = scalar_lea.vmem %s2, %s153
      %v155 = vld [vmem:[%s145] sm:$0xff]
      %v156 = vld [vmem:[%s145 + $0x8] sm:$0xff]
      %v157 = vadd.f32 %v155, %v156
      %158 = vadd.xlane.f32.xlu0 %v157
      %v159 = vpop.xlane.xlu0 %158
      %vm160 = vcmask 7168
      %161 = vst.msk [vmem:[%s150] sm:$0xff] %vm160, %v159
      %v162 = vmul.f32 %v155, %v155
      %v163 = vmul.f32 %v156, %v156
      %v164 = vadd.f32 %v162, %v163
      %165 = vadd.xlane.f32.xlu0 %v164
      %v166 = vpop.xlane.xlu0 %165
      %167 = vst.msk [vmem:[%s154] sm:$0xff] %vm160, %v166
      %p168 = scmp.lt.s32.totalorder %s14, 1
      %s169 = scalar_select %p168, %s14, 1
      %s170 = smul.addr %s169, 8
      %s171 = scalar_lea.vmem %s1, %s170
      %p172 = scmp.lt.s32.totalorder %s14, 1
      %s173 = scalar_select %p172, %s14, 1
      %s174 = smul.addr %s173, 8
      %s175 = scalar_lea.vmem %s2, %s174
      // Predicated region
      $region25: #{resblock_forward.4} parent=23 // pred_check
        %p176 = pneg %p58
      $region26: #{resblock_forward.4} parent=23 // pred_check_branch
        %178 = sbr.rel (%p176) target = $region28
      $region27: #{resblock_forward.4} parent=23 // pred_region
        _
      $region28: #{resblock_forward.4} parent=23 // pred_fallthru
        _
      // Predicated region
      $region29: #{resblock_forward.4} parent=23 // pred_check
        %p179 = pneg %p84
      $region30: #{resblock_forward.4} parent=23 // pred_check_branch
        %181 = sbr.rel (%p179) target = $region32
      $region31: #{resblock_forward.4} parent=23 // pred_region
        _
      $region32: #{resblock_forward.4} parent=23 // pred_fallthru
        _
    $region24: #{resblock_forward.4} parent=5 // pred_fallthru
      _
    %p182 = scmp.le.s32.totalorder 2, %s9
    // Predicated region
    $region33: #{resblock_forward.4} parent=5 // pred_check
      %p183 = pneg %p182
    $region34: #{resblock_forward.4} parent=5 // pred_check_branch
      %185 = sbr.rel (%p183) target = $region36
    $region35: #{resblock_forward.4} parent=5 // pred_region
      %s186 = ssub.s32 %s9, 2
      // Predicated region
      $region37: #{resblock_forward.4} parent=35 // pred_check
        %p187 = pneg %p64
      $region38: #{resblock_forward.4} parent=35 // pred_check_branch
        %189 = sbr.rel (%p187) target = $region40
      $region39: #{resblock_forward.4} parent=35 // pred_region
        %p190 = scmp.lt.s32.totalorder %s15, 1
        %s191 = scalar_select %p190, %s15, 1
        %s192 = smul.addr %s191, 8
        %s193 = scalar_lea.vmem %s1, %s192
      $region40: #{resblock_forward.4} parent=35 // pred_fallthru
        _
      // Predicated region
      $region41: #{resblock_forward.4} parent=35 // pred_check
        %p194 = pneg %p90
      $region42: #{resblock_forward.4} parent=35 // pred_check_branch
        %196 = sbr.rel (%p194) target = $region44
      $region43: #{resblock_forward.4} parent=35 // pred_region
        %p197 = scmp.lt.s32.totalorder %s15, 1
        %s198 = scalar_select %p197, %s15, 1
        %s199 = smul.addr %s198, 8
        %s200 = scalar_lea.vmem %s2, %s199
      $region44: #{resblock_forward.4} parent=35 // pred_fallthru
        _
    $region36: #{resblock_forward.4} parent=5 // pred_fallthru
      _
  $region6: #{resblock_forward.4} parent=0 // loop_footer
    %s13 = sadd.s32 1, %s9
  $region7: #{resblock_forward.4} parent=0 // loop_footer_branch
    %8 = sbr.rel target = $region3
  $region8: #{resblock_forward.4} parent=0 // loop_exit
    _

// kernel: resblock_forward.7
$region0: #{resblock_forward.7}
  #allocation0 [shape = 'u32[]', space=smem, size = 0x4, offset = 0x4, fixed_abs, tag = 'smem constant byte address 0x4 - core index']
  #allocation1 [shape = 'u32[144,128]{1,0:T(1,128)}', space=vmem, size = 0x12000, scoped, tag = 'internal scratch']
  %s0 = inlined_call_operand.vmem [shape: f32[8,1], index: 0, kind: input, shape index: {}]
  %s1 = inlined_call_operand.vmem [shape: f32[8,1], index: 1, kind: input, shape index: {}]
  %s2 = inlined_call_operand.vmem [shape: bf16[9,8,8], index: 2, kind: input, shape index: {}]
  %s3 = inlined_call_operand.vmem [shape: bf16[8,8], index: 3, kind: input, shape index: {}]
  %s4 = inlined_call_operand.vmem [shape: f32[8,1], index: 4, kind: input, shape index: {}]
  %s5 = inlined_call_operand.vmem [shape: f32[8,512], index: 5, kind: input, shape index: {}]
  %s6 = inlined_call_operand.vmem [shape: f32[8,512], index: 6, kind: input, shape index: {}]
  %s7 = inlined_call_operand.vmem [shape: f32[8,512], index: 7, kind: output, shape index: {}]
  %s8 = sld [smem:[#allocation0]]
  $region61: #{resblock_forward.7} parent=0
    _
  %s10 = ssub.s32 1, %s8
  %s11 = scalar_select 0, %s10, %s8
  loop: start=0, step=1, limit=4
  $region2: #{resblock_forward.7} parent=0 // loop_pre_header
    _
  $region3: #{resblock_forward.7} parent=0 // loop_header
    %s13 = sphi 0, %s17
    %p14 = scmp.ge.s32.totalorder %s13, 4
    %s21 = sphi 0, %s21
    %s23 = sphi 0, %s21
    %s24 = sphi 0, %s23
    %s38 = sphi 0, %s24
    %s42 = sphi 0, %s42
    %s44 = sphi 0, %s42
    %s45 = sphi 0, %s44
    %s59 = sphi 0, %s45
    %s63 = sphi 0, %s63
    %s65 = sphi 0, %s63
    %s66 = sphi 0, %s65
    %s80 = sphi 0, %s66
    %s84 = sphi 0, %s84
    %s86 = sphi 0, %s84
    %s87 = sphi 0, %s86
    %s101 = sphi 0, %s87
    %s105 = sphi 0, %s105
    %s107 = sphi 0, %s105
    %s108 = sphi 0, %s107
    %s122 = sphi 0, %s108
    %s128 = sphi 0, %s130
    %s131 = sphi 0, %s128
    %s132 = sphi 0, %s131
    %s148 = sphi 0, %s132
    %s154 = sphi 0, %s156
    %s157 = sphi 0, %s154
    %s158 = sphi 0, %s157
    %s174 = sphi 0, %s158
    %s180 = sphi 0, %s182
    %s183 = sphi 0, %s180
    %s184 = sphi 0, %s183
    %s200 = sphi 0, %s184
  $region4: #{resblock_forward.7} parent=0 // loop_header_branch
    %16 = sbr.rel (%p14) target = $region8
  $region5: #{resblock_forward.7} parent=0 // loop_body
    %s18 = ssub.s32 %s13, 1
    %s19 = ssub.s32 %s13, 2
    %s20 = sadd.s32 %s13, 1
    %s22 = sadd.s32 %s21, 1
    %p25 = scmp.eq.s32.totalorder %s13, 1
    %p26 = scmp.ne.s32.totalorder %s21, %s23
    %p27 = scmp.eq.s32.totalorder %s13, 0
    %p28 = por %p26, %p27
    %p29 = scmp.ne.s32.totalorder %s21, %s23
    %p30 = scmp.eq.s32.totalorder %s18, 1
    %p31 = por %p29, %p30
    %p32 = scmp.ne.s32.totalorder %s23, %s24
    %p33 = scmp.eq.s32.totalorder %s18, 0
    %p34 = por %p32, %p33
    %p35 = scmp.ne.s32.totalorder %s23, %s24
    %p36 = scmp.eq.s32.totalorder %s19, 1
    %p37 = por %p35, %p36
    %p39 = scmp.ne.s32.totalorder %s24, %s38
    %p40 = scmp.eq.s32.totalorder %s19, 0
    %p41 = por %p39, %p40
    %s43 = sadd.s32 %s42, 1
    %p46 = scmp.eq.s32.totalorder %s13, 1
    %p47 = scmp.ne.s32.totalorder %s42, %s44
    %p48 = scmp.eq.s32.totalorder %s13, 0
    %p49 = por %p47, %p48
    %p50 = scmp.ne.s32.totalorder %s42, %s44
    %p51 = scmp.eq.s32.totalorder %s18, 1
    %p52 = por %p50, %p51
    %p53 = scmp.ne.s32.totalorder %s44, %s45
    %p54 = scmp.eq.s32.totalorder %s18, 0
    %p55 = por %p53, %p54
    %p56 = scmp.ne.s32.totalorder %s44, %s45
    %p57 = scmp.eq.s32.totalorder %s19, 1
    %p58 = por %p56, %p57
    %p60 = scmp.ne.s32.totalorder %s45, %s59
    %p61 = scmp.eq.s32.totalorder %s19, 0
    %p62 = por %p60, %p61
    %s64 = sadd.s32 %s63, 1
    %p67 = scmp.eq.s32.totalorder %s13, 1
    %p68 = scmp.ne.s32.totalorder %s63, %s65
    %p69 = scmp.eq.s32.totalorder %s13, 0
    %p70 = por %p68, %p69
    %p71 = scmp.ne.s32.totalorder %s63, %s65
    %p72 = scmp.eq.s32.totalorder %s18, 1
    %p73 = por %p71, %p72
    %p74 = scmp.ne.s32.totalorder %s65, %s66
    %p75 = scmp.eq.s32.totalorder %s18, 0
    %p76 = por %p74, %p75
    %p77 = scmp.ne.s32.totalorder %s65, %s66
    %p78 = scmp.eq.s32.totalorder %s19, 1
    %p79 = por %p77, %p78
    %p81 = scmp.ne.s32.totalorder %s66, %s80
    %p82 = scmp.eq.s32.totalorder %s19, 0
    %p83 = por %p81, %p82
    %s85 = sadd.s32 %s84, 1
    %p88 = scmp.eq.s32.totalorder %s13, 1
    %p89 = scmp.ne.s32.totalorder %s84, %s86
    %p90 = scmp.eq.s32.totalorder %s13, 0
    %p91 = por %p89, %p90
    %p92 = scmp.ne.s32.totalorder %s84, %s86
    %p93 = scmp.eq.s32.totalorder %s18, 1
    %p94 = por %p92, %p93
    %p95 = scmp.ne.s32.totalorder %s86, %s87
    %p96 = scmp.eq.s32.totalorder %s18, 0
    %p97 = por %p95, %p96
    %p98 = scmp.ne.s32.totalorder %s86, %s87
    %p99 = scmp.eq.s32.totalorder %s19, 1
    %p100 = por %p98, %p99
    %p102 = scmp.ne.s32.totalorder %s87, %s101
    %p103 = scmp.eq.s32.totalorder %s19, 0
    %p104 = por %p102, %p103
    %s106 = sadd.s32 %s105, 1
    %p109 = scmp.eq.s32.totalorder %s13, 1
    %p110 = scmp.ne.s32.totalorder %s105, %s107
    %p111 = scmp.eq.s32.totalorder %s13, 0
    %p112 = por %p110, %p111
    %p113 = scmp.ne.s32.totalorder %s105, %s107
    %p114 = scmp.eq.s32.totalorder %s18, 1
    %p115 = por %p113, %p114
    %p116 = scmp.ne.s32.totalorder %s107, %s108
    %p117 = scmp.eq.s32.totalorder %s18, 0
    %p118 = por %p116, %p117
    %p119 = scmp.ne.s32.totalorder %s107, %s108
    %p120 = scmp.eq.s32.totalorder %s19, 1
    %p121 = por %p119, %p120
    %p123 = scmp.ne.s32.totalorder %s108, %s122
    %p124 = scmp.eq.s32.totalorder %s19, 0
    %p125 = por %p123, %p124
    %s126 = ssub.s32 %s13, %s20
    %p127 = scmp.eq.s32.totalorder %s126, 0
    %s129 = sadd.s32 %s128, 1
    %s130 = scalar_select %p127, %s128, %s129
    %p133 = pneg %p127
    %p134 = scmp.eq.s32.totalorder %s13, 1
    %p135 = por %p133, %p134
    %p136 = scmp.ne.s32.totalorder %s128, %s131
    %p137 = scmp.eq.s32.totalorder %s13, 0
    %p138 = por %p136, %p137
    %p139 = scmp.ne.s32.totalorder %s128, %s131
    %p140 = scmp.eq.s32.totalorder %s18, 1
    %p141 = por %p139, %p140
    %p142 = scmp.ne.s32.totalorder %s131, %s132
    %p143 = scmp.eq.s32.totalorder %s18, 0
    %p144 = por %p142, %p143
    %p145 = scmp.ne.s32.totalorder %s131, %s132
    %p146 = scmp.eq.s32.totalorder %s19, 1
    %p147 = por %p145, %p146
    %p149 = scmp.ne.s32.totalorder %s132, %s148
    %p150 = scmp.eq.s32.totalorder %s19, 0
    %p151 = por %p149, %p150
    %s152 = ssub.s32 %s13, %s20
    %p153 = scmp.eq.s32.totalorder %s152, 0
    %s155 = sadd.s32 %s154, 1
    %s156 = scalar_select %p153, %s154, %s155
    %p159 = pneg %p153
    %p160 = scmp.eq.s32.totalorder %s13, 1
    %p161 = por %p159, %p160
    %p162 = scmp.ne.s32.totalorder %s154, %s157
    %p163 = scmp.eq.s32.totalorder %s13, 0
    %p164 = por %p162, %p163
    %p165 = scmp.ne.s32.totalorder %s154, %s157
    %p166 = scmp.eq.s32.totalorder %s18, 1
    %p167 = por %p165, %p166
    %p168 = scmp.ne.s32.totalorder %s157, %s158
    %p169 = scmp.eq.s32.totalorder %s18, 0
    %p170 = por %p168, %p169
    %p171 = scmp.ne.s32.totalorder %s157, %s158
    %p172 = scmp.eq.s32.totalorder %s19, 1
    %p173 = por %p171, %p172
    %p175 = scmp.ne.s32.totalorder %s158, %s174
    %p176 = scmp.eq.s32.totalorder %s19, 0
    %p177 = por %p175, %p176
    %s178 = ssub.s32 %s13, %s20
    %p179 = scmp.eq.s32.totalorder %s178, 0
    %s181 = sadd.s32 %s180, 1
    %s182 = scalar_select %p179, %s180, %s181
    %p185 = pneg %p179
    %p186 = scmp.eq.s32.totalorder %s13, 1
    %p187 = por %p185, %p186
    %p188 = scmp.ne.s32.totalorder %s180, %s183
    %p189 = scmp.eq.s32.totalorder %s13, 0
    %p190 = por %p188, %p189
    %p191 = scmp.ne.s32.totalorder %s180, %s183
    %p192 = scmp.eq.s32.totalorder %s18, 1
    %p193 = por %p191, %p192
    %p194 = scmp.ne.s32.totalorder %s183, %s184
    %p195 = scmp.eq.s32.totalorder %s18, 0
    %p196 = por %p194, %p195
    %p197 = scmp.ne.s32.totalorder %s183, %s184
    %p198 = scmp.eq.s32.totalorder %s19, 1
    %p199 = por %p197, %p198
    %p201 = scmp.ne.s32.totalorder %s184, %s200
    %p202 = scmp.eq.s32.totalorder %s19, 0
    %p203 = por %p201, %p202
    %p204 = scmp.le.s32.totalorder 1, %s13
    %p205 = scmp.lt.s32.totalorder %s13, 3
    %p206 = pnand %p204, %p205
    %p207 = pneg %p206
    // Predicated region
    $region9: #{resblock_forward.7} parent=5 // pred_check
      _
    $region10: #{resblock_forward.7} parent=5 // pred_check_branch
      %209 = sbr.rel (%p206) target = $region12
    $region11: #{resblock_forward.7} parent=5 // pred_region
      %s210 = ssub.s32 %s13, 1
      // Predicated region
      $region13: #{resblock_forward.7} parent=11 // pred_check
        %p211 = pneg %p34
      $region14: #{resblock_forward.7} parent=11 // pred_check_branch
        %213 = sbr.rel (%p211) target = $region16
      $region15: #{resblock_forward.7} parent=11 // pred_region
        _
      $region16: #{resblock_forward.7} parent=11 // pred_fallthru
        _
      // Predicated region
      $region17: #{resblock_forward.7} parent=11 // pred_check
        %p214 = pneg %p55
      $region18: #{resblock_forward.7} parent=11 // pred_check_branch
        %216 = sbr.rel (%p214) target = $region20
      $region19: #{resblock_forward.7} parent=11 // pred_region
        _
      $region20: #{resblock_forward.7} parent=11 // pred_fallthru
        _
      // Predicated region
      $region21: #{resblock_forward.7} parent=11 // pred_check
        %p217 = pneg %p76
      $region22: #{resblock_forward.7} parent=11 // pred_check_branch
        %219 = sbr.rel (%p217) target = $region24
      $region23: #{resblock_forward.7} parent=11 // pred_region
        _
      $region24: #{resblock_forward.7} parent=11 // pred_fallthru
        _
      // Predicated region
      $region25: #{resblock_forward.7} parent=11 // pred_check
        %p220 = pneg %p97
      $region26: #{resblock_forward.7} parent=11 // pred_check_branch
        %222 = sbr.rel (%p220) target = $region28
      $region27: #{resblock_forward.7} parent=11 // pred_region
        _
      $region28: #{resblock_forward.7} parent=11 // pred_fallthru
        _
      // Predicated region
      $region29: #{resblock_forward.7} parent=11 // pred_check
        %p223 = pneg %p118
      $region30: #{resblock_forward.7} parent=11 // pred_check_branch
        %225 = sbr.rel (%p223) target = $region32
      $region31: #{resblock_forward.7} parent=11 // pred_region
        _
      $region32: #{resblock_forward.7} parent=11 // pred_fallthru
        _
    $region12: #{resblock_forward.7} parent=5 // pred_fallthru
      _
    %p226 = scmp.lt.s32.totalorder %s13, 2
    // Predicated region
    $region33: #{resblock_forward.7} parent=5 // pred_check
      %p227 = pneg %p226
    $region34: #{resblock_forward.7} parent=5 // pred_check_branch
      %229 = sbr.rel (%p227) target = $region36
    $region35: #{resblock_forward.7} parent=5 // pred_region
      // Predicated region
      $region37: #{resblock_forward.7} parent=35 // pred_check
        %p230 = pneg %p138
      $region38: #{resblock_forward.7} parent=35 // pred_check_branch
        %232 = sbr.rel (%p230) target = $region40
      $region39: #{resblock_forward.7} parent=35 // pred_region
        %s233 = smul.u32 2, %s13
        %p234 = scmp.lt.s32.totalorder %s233, 3
        %s235 = scalar_select %p234, %s233, 3
        %s236 = smul.addr %s235, 8
        %s237 = scalar_lea.vmem %s5, %s236
        %s238 = smul.u32 2, %s13
      $region40: #{resblock_forward.7} parent=35 // pred_fallthru
        _
      // Predicated region
      $region41: #{resblock_forward.7} parent=35 // pred_check
        %p239 = pneg %p164
      $region42: #{resblock_forward.7} parent=35 // pred_check_branch
        %241 = sbr.rel (%p239) target = $region44
      $region43: #{resblock_forward.7} parent=35 // pred_region
        %s242 = smul.u32 2, %s13
        %p243 = scmp.lt.s32.totalorder %s242, 3
        %s244 = scalar_select %p243, %s242, 3
        %s245 = smul.addr %s244, 8
        %s246 = scalar_lea.vmem %s6, %s245
        %s247 = smul.u32 2, %s13
      $region44: #{resblock_forward.7} parent=35 // pred_fallthru
        _
    $region36: #{resblock_forward.7} parent=5 // pred_fallthru
      _
    %p248 = scmp.le.s32.totalorder 1, %s13
    %p249 = scmp.lt.s32.totalorder %s13, 3
    %p250 = pnand %p248, %p249
    %p251 = pneg %p250
    // Predicated region
    $region45: #{resblock_forward.7} parent=5 // pred_check
      _
    $region46: #{resblock_forward.7} parent=5 // pred_check_branch
      %253 = sbr.rel (%p250) target = $region48
    $region47: #{resblock_forward.7} parent=5 // pred_region
      %s254 = ssub.s32 %s13, 1
      %p255 = pneg %p34
      %p256 = pneg %p31
      %p257 = pneg %p55
      %p258 = pneg %p52
      %p259 = pneg %p76
      %p260 = pneg %p73
      %p261 = pneg %p97
      %p262 = pneg %p94
      %p263 = pneg %p118
      %p264 = pneg %p115
      %s265 = smul.u32 2, %s18
      %p266 = scmp.lt.s32.totalorder %s265, 3
      %s267 = scalar_select %p266, %s265, 3
      %s268 = smul.addr %s267, 8
      %s269 = scalar_lea.vmem %s5, %s268
      %p270 = pneg %p144
      %p271 = pneg %p141
      %s272 = smul.u32 2, %s18
      %p273 = scmp.lt.s32.totalorder %s272, 3
      %s274 = scalar_select %p273, %s272, 3
      %s275 = smul.addr %s274, 8
      %s276 = scalar_lea.vmem %s6, %s275
      %p277 = pneg %p170
      %p278 = pneg %p167
      %p279 = pneg %p196
      %p280 = pneg %p193
      %s281 = smul.u32 2, %s18
      %p282 = scmp.lt.s32.totalorder %s281, 3
      %s283 = scalar_select %p282, %s281, 3
      %s284 = smul.addr %s283, 8
      %s285 = scalar_lea.vmem %s7, %s284
      %s286 = smul.u32 2, %s18
      %p287 = scmp.lt.s32.totalorder %s286, 3
      %s288 = scalar_select %p287, %s286, 3
      %s289 = smul.addr %s288, 8
      %s290 = scalar_lea.vmem %s5, %s289
      %s291 = smul.u32 2, %s18
      %s292 = smul.u32 2, %s18
      %p293 = scmp.lt.s32.totalorder %s292, 3
      %s294 = scalar_select %p293, %s292, 3
      %s295 = smul.addr %s294, 8
      %s296 = scalar_lea.vmem %s6, %s295
      %s297 = smul.u32 2, %s18
      %s298 = smul.u32 2, %s18
      %p299 = scmp.lt.s32.totalorder %s298, 3
      %s300 = scalar_select %p299, %s298, 3
      %s301 = smul.addr %s300, 8
      %s302 = scalar_lea.vmem %s7, %s301
      %s303 = smul.u32 2, %s18
      %v305 = vld [vmem:[%s290] sm:$0xff]
      %v306 = vld [vmem:[%s290 + $0x8] sm:$0xff]
      %v307 = vld [vmem:[%s0] sm:$0xff]
      %v308 = vld [vmem:[%s1] sm:$0xff]
      %310 = vset.pattern.permute.xlu0 0
      %311 = vperm.xlu0 %310, %v307
      %v312 = vpop.permute.xlu0 %311
      %v314 = vmul.f32 %v305, %v312
      %v315 = vmul.f32 %v306, %v312
      %317 = vset.pattern.permute.xlu0 0
      %318 = vperm.xlu0 %317, %v308
      %v319 = vpop.permute.xlu0 %318
      %v321 = vadd.f32 %v314, %v319
      %v322 = vadd.f32 %v315, %v319
      %v323 = vmul.f32 %v321, 0.1
      %v324 = vmul.f32 %v322, 0.1
      %v325 = vmax.f32 %v321, %v323
      %v326 = vmax.f32 %v322, %v324
      %v327 = vlaneseq
      %v328 = vand.u32 %v327, 127
      %v329 = vadd.s32 %v328, 128
      %vm330 = vcmp.lt.s32.totalorder %v328, 0
      %v331 = vsub.s32 0, %v328
      %v332 = vsel %vm330, %v331, %v328
      %v333 = vshrl.u32 %v332, 8
      %v334 = vand.u32 %v332, 255
      %v335 = vsub.s32 0, %v334
      %v336 = vsel %vm330, %v335, %v334
      %vm337 = vcmp.lt.s32.totalorder %v329, 0
      %v338 = vsub.s32 0, %v329
      %v339 = vsel %vm337, %v338, %v329
      %v340 = vshrl.u32 %v339, 8
      %v341 = vand.u32 %v339, 255
      %v342 = vsub.s32 0, %v341
      %v343 = vsel %vm337, %v342, %v341
      %vm344 = vcmp.ne.s32.totalorder %v336, 0
      %vm345 = vcmp.ne.s32.totalorder %v343, 0
      %vm346 = vcmp.lt.s32.totalorder %v336, 0
      %vm347 = vcmp.lt.s32.totalorder %v343, 0
      %vm348 = vmand %vm346, %vm344
      %vm349 = vmand %vm347, %vm345
      %v350 = vadd.s32 %v336, 256
      %v351 = vadd.s32 %v343, 256
      %v352 = vsel %vm348, %v350, %v336
      %v353 = vsel %vm349, %v351, %v343
      %vm354 = vcmp.lt.s32.totalorder %v328, 0
      %v355 = vsub.s32 0, %v328
      %v356 = vsel %vm354, %v355, %v328
      %v357 = vshrl.u32 %v356, 4
      %v358 = vand.u32 %v356, 15
      %v359 = vsub.s32 0, %v358
      %v360 = vsel %vm354, %v359, %v358
      %vm361 = vcmp.lt.s32.totalorder %v329, 0
      %v362 = vsub.s32 0, %v329
      %v363 = vsel %vm361, %v362, %v329
      %v364 = vshrl.u32 %v363, 4
      %v365 = vand.u32 %v363, 15
      %v366 = vsub.s32 0, %v365
      %v367 = vsel %vm361, %v366, %v365
      %vm368 = vcmp.ne.s32.totalorder %v360, 0
      %vm369 = vcmp.ne.s32.totalorder %v367, 0
      %vm370 = vcmp.lt.s32.totalorder %v360, 0
      %vm371 = vcmp.lt.s32.totalorder %v367, 0
      %vm372 = vmand %vm370, %vm368
      %vm373 = vmand %vm371, %vm369
      %v374 = vadd.s32 %v360, 16
      %v375 = vadd.s32 %v367, 16
      %v376 = vsel %vm372, %v374, %v360
      %v377 = vsel %vm373, %v375, %v367
      %vm378 = vcmp.ge.s32.totalorder %v352, 16
      %vm379 = vcmp.ge.s32.totalorder %v353, 16
      %v380 = vsel %vm378, 1, 0
      %v381 = vsel %vm379, 1, 0
      %v382 = vcvt.s32.f32 %v380
      %v383 = vcvt.s32.f32 %v381
      %vm384 = vcmp.lt.s32.totalorder %v352, 240
      %vm385 = vcmp.lt.s32.totalorder %v353, 240
      %v386 = vsel %vm384, 1, 0
      %v387 = vsel %vm385, 1, 0
      %v388 = vcvt.s32.f32 %v386
      %v389 = vcvt.s32.f32 %v387
      %vm390 = vcmp.ge.s32.totalorder %v376, 1
      %vm391 = vcmp.ge.s32.totalorder %v377, 1
      %v392 = vsel %vm390, 1, 0
      %v393 = vsel %vm391, 1, 0
      %v394 = vcvt.s32.f32 %v392
      %v395 = vcvt.s32.f32 %v393
      %vm396 = vcmp.lt.s32.totalorder %v376, 15
      %vm397 = vcmp.lt.s32.totalorder %v377, 15
      %v398 = vsel %vm396, 1, 0
      %v399 = vsel %vm397, 1, 0
      %v400 = vcvt.s32.f32 %v398
      %v401 = vcvt.s32.f32 %v399
      %v402 = vmul.f32 %v382, %v394
      %v403 = vmul.f32 %v383, %v395
      %v404 = vmul.f32 %v382, %v400
      %v405 = vmul.f32 %v383, %v401
      %v406 = vmul.f32 %v388, %v394
      %v407 = vmul.f32 %v389, %v395
      %v408 = vmul.f32 %v388, %v400
      %v409 = vmul.f32 %v389, %v401
      %410 = vrot.lane.b32.xlu0 %v325, 17
      %v411 = vpop.permute.xlu0 %410
      %412 = vrot.lane.b32.xlu0 %v326, 17
      %v413 = vpop.permute.xlu0 %412
      %vm414 = vcmp.lt.s32.totalorder %v328, 17
      %v415 = vsel %vm414, %v411, %v413
      %v416 = vsel %vm414, %v413, %v411
      %v417 = vmul.f32 %v416, %v402
      %v418 = vmul.f32 %v415, %v403
      %v419 = vld [vmem:[%s2] sm:$0xf]
      %v420 = vpack.c.bf16 %v417, %v417
      %v421 = vpack.c.bf16 %v418, %v418
      %422 = vrot.lane.b32.xlu0 %v325, 16
      %v423 = vpop.permute.xlu0 %422
      %424 = vrot.lane.b32.xlu0 %v326, 16
      %v425 = vpop.permute.xlu0 %424
      %vm426 = vcmp.lt.s32.totalorder %v328, 16
      %v427 = vsel %vm426, %v423, %v425
      %v428 = vsel %vm426, %v425, %v423
      %v429 = vmul.f32 %v428, %v382
      %v430 = vmul.f32 %v427, %v383
      %s431 = scalar_lea.vmem %s2, 4
      %v432 = vld [vmem:[%s431] sm:$0xf]
      %v433 = vpack.c.bf16 %v429, %v429
      %v434 = vpack.c.bf16 %v430, %v430
      %vm435 = vcmask 64512
      %v437 = vsel %vm435, %v432, 0
      %vm439 = vcmask 1043456
      %v441 = vsel %vm439, %v433, 0
      %v444 = vsel %vm439, %v434, 0
      %446 = vmatprep.subr.bf16.mxu0 0
      %447 = vmatpush1.bf16.msra.mxu0 0
      %448 = vmatprep.subr.bf16.mxu0 0
      %449 = vmatpush1.bf16.msra.mxu0 0
      %450 = vmatprep.subr.bf16.mxu0 0
      %451 = vmatpush1.bf16.msra.mxu0 0
      %452 = vmatprep.subr.bf16.mxu0 0
      %453 = vmatpush1.bf16.msra.mxu0 0
      %454 = vmatprep.subr.bf16.mxu0 0
      %455 = vmatpush1.bf16.msra.mxu0 0
      %456 = vmatprep.subr.bf16.mxu0 0
      %457 = vmatpush1.bf16.msra.mxu0 0
      %458 = vmatprep.subr.bf16.mxu0 0
      %459 = vmatpush1.bf16.msra.mxu0 0
      %460 = vmatprep.subr.bf16.mxu0 %v444
      %461 = vmatpush1.bf16.msra.mxu0 %v441
      %462 = vmatprep.subr.bf16.mxu0 0
      %463 = vmatpush2.bf16.msra.mxu0 0
      %464 = vmatprep.subr.bf16.mxu0 0
      %465 = vmatpush2.bf16.msra.mxu0 0
      %466 = vmatprep.subr.bf16.mxu0 0
      %467 = vmatpush2.bf16.msra.mxu0 0
      %468 = vmatprep.subr.bf16.mxu0 0
      %469 = vmatpush2.bf16.msra.mxu0 0
      %470 = vmatprep.subr.bf16.mxu0 0
      %471 = vmatpush2.bf16.msra.mxu0 0
      %472 = vmatprep.subr.bf16.mxu0 0
      %473 = vmatpush2.bf16.msra.mxu0 0
      %474 = vmatprep.subr.bf16.mxu0 0
      %475 = vmatpush2.bf16.msra.mxu0 0
      %476 = vmatprep.subr.bf16.mxu0 0
      %477 = vmatpush2.bf16.msra.mxu0 0
      %478 = vmatprep.mubr.bf16.mxu0 0
      %479 = vmatmul.mubr.bf16.gmra.mxu0 %v437
      %v480 = vpop.f32.mrf.mxu0
      %v481 = vadd.f32 0.0, %v480
      %v482 = vpop.f32.mrf.mxu0
      %v483 = vadd.f32 0.0, %v482
      %v484 = vpop.f32.mrf.mxu0
      %v485 = vpop.f32.mrf.mxu0
      %486 = vdwg.mxu0
      %v488 = vsel %vm435, %v419, 0
      %v491 = vsel %vm439, %v420, 0
      %v494 = vsel %vm439, %v421, 0
      %496 = vmatprep.subr.bf16.mxu0 0
      %497 = vmatpush1.bf16.msra.mxu0 0
      %498 = vmatprep.subr.bf16.mxu0 0
      %499 = vmatpush1.bf16.msra.mxu0 0
      %500 = vmatprep.subr.bf16.mxu0 0
      %501 = vmatpush1.bf16.msra.mxu0 0
      %502 = vmatprep.subr.bf16.mxu0 0
      %503 = vmatpush1.bf16.msra.mxu0 0
      %504 = vmatprep.subr.bf16.mxu0 0
      %505 = vmatpush1.bf16.msra.mxu0 0
      %506 = vmatprep.subr.bf16.mxu0 0
      %507 = vmatpush1.bf16.msra.mxu0 0
      %508 = vmatprep.subr.bf16.mxu0 0
      %509 = vmatpush1.bf16.msra.mxu0 0
      %510 = vmatprep.subr.bf16.mxu0 %v494
      %511 = vmatpush1.bf16.msra.mxu0 %v491
      %512 = vmatprep.subr.bf16.mxu0 0
      %513 = vmatpush2.bf16.msra.mxu0 0
      %514 = vmatprep.subr.bf16.mxu0 0
      %515 = vmatpush2.bf16.msra.mxu0 0
      %516 = vmatprep.subr.bf16.mxu0 0
      %517 = vmatpush2.bf16.msra.mxu0 0
      %518 = vmatprep.subr.bf16.mxu0 0
      %519 = vmatpush2.bf16.msra.mxu0 0
      %520 = vmatprep.subr.bf16.mxu0 0
      %521 = vmatpush2.bf16.msra.mxu0 0
      %522 = vmatprep.subr.bf16.mxu0 0
      %523 = vmatpush2.bf16.msra.mxu0 0
      %524 = vmatprep.subr.bf16.mxu0 0
      %525 = vmatpush2.bf16.msra.mxu0 0
      %526 = vmatprep.subr.bf16.mxu0 0
      %527 = vmatpush2.bf16.msra.mxu0 0
      %528 = vmatprep.mubr.bf16.mxu0 0
      %529 = vmatmul.mubr.bf16.gmra.mxu0 %v488
      %v530 = vpop.f32.mrf.mxu0
      %v531 = vadd.f32 %v481, %v530
      %v532 = vpop.f32.mrf.mxu0
      %v533 = vadd.f32 %v483, %v532
      %v534 = vpop.f32.mrf.mxu0
      %v535 = vpop.f32.mrf.mxu0
      %536 = vdwg.mxu0
      %537 = vrot.lane.b32.xlu0 %v325, 15
      %v538 = vpop.permute.xlu0 %537
      %539 = vrot.lane.b32.xlu0 %v326, 15
      %v540 = vpop.permute.xlu0 %539
      %vm541 = vcmp.lt.s32.totalorder %v328, 15
      %v542 = vsel %vm541, %v538, %v540
      %v543 = vsel %vm541, %v540, %v538
      %v544 = vmul.f32 %v543, %v404
      %v545 = vmul.f32 %v542, %v405
      %s546 = scalar_lea.vmem %s2, 8
      %v547 = vld [vmem:[%s546] sm:$0xf]
      %v548 = vpack.c.bf16 %v544, %v544
      %v549 = vpack.c.bf16 %v545, %v545
      %v551 = vsel %vm435, %v547, 0
      %v554 = vsel %vm439, %v548, 0
      %v557 = vsel %vm439, %v549, 0
      %559 = vmatprep.subr.bf16.mxu0 0
      %560 = vmatpush1.bf16.msra.mxu0 0
      %561 = vmatprep.subr.bf16.mxu0 0
      %562 = vmatpush1.bf16.msra.mxu0 0
      %563 = vmatprep.subr.bf16.mxu0 0
      %564 = vmatpush1.bf16.msra.mxu0 0
      %565 = vmatprep.subr.bf16.mxu0 0
      %566 = vmatpush1.bf16.msra.mxu0 0
      %567 = vmatprep.subr.bf16.mxu0 0
      %568 = vmatpush1.bf16.msra.mxu0 0
      %569 = vmatprep.subr.bf16.mxu0 0
      %570 = vmatpush1.bf16.msra.mxu0 0
      %571 = vmatprep.subr.bf16.mxu0 0
      %572 = vmatpush1.bf16.msra.mxu0 0
      %573 = vmatprep.subr.bf16.mxu0 %v557
      %574 = vmatpush1.bf16.msra.mxu0 %v554
      %575 = vmatprep.subr.bf16.mxu0 0
      %576 = vmatpush2.bf16.msra.mxu0 0
      %577 = vmatprep.subr.bf16.mxu0 0
      %578 = vmatpush2.bf16.msra.mxu0 0
      %579 = vmatprep.subr.bf16.mxu0 0
      %580 = vmatpush2.bf16.msra.mxu0 0
      %581 = vmatprep.subr.bf16.mxu0 0
      %582 = vmatpush2.bf16.msra.mxu0 0
      %583 = vmatprep.subr.bf16.mxu0 0
      %584 = vmatpush2.bf16.msra.mxu0 0
      %585 = vmatprep.subr.bf16.mxu0 0
      %586 = vmatpush2.bf16.msra.mxu0 0
      %587 = vmatprep.subr.bf16.mxu0 0
      %588 = vmatpush2.bf16.msra.mxu0 0
      %589 = vmatprep.subr.bf16.mxu0 0
      %590 = vmatpush2.bf16.msra.mxu0 0
      %591 = vmatprep.mubr.bf16.mxu0 0
      %592 = vmatmul.mubr.bf16.gmra.mxu0 %v551
      %v593 = vpop.f32.mrf.mxu0
      %v594 = vadd.f32 0.0, %v593
      %v595 = vpop.f32.mrf.mxu0
      %v596 = vadd.f32 0.0, %v595
      %v597 = vpop.f32.mrf.mxu0
      %v598 = vpop.f32.mrf.mxu0
      %599 = vdwg.mxu0
      %v600 = vadd.f32 %v531, %v594
      %v601 = vadd.f32 %v533, %v596
      %602 = vrot.lane.b32.xlu0 %v325, 1
      %v603 = vpop.permute.xlu0 %602
      %604 = vrot.lane.b32.xlu0 %v326, 1
      %v605 = vpop.permute.xlu0 %604
      %vm606 = vcmp.lt.s32.totalorder %v328, 1
      %v607 = vsel %vm606, %v603, %v605
      %v608 = vsel %vm606, %v605, %v603
      %v609 = vmul.f32 %v608, %v394
      %v610 = vmul.f32 %v607, %v395
      %s611 = scalar_lea.vmem %s2, 12
      %v612 = vld [vmem:[%s611] sm:$0xf]
      %v613 = vpack.c.bf16 %v609, %v609
      %v614 = vpack.c.bf16 %v610, %v610
      %v616 = vsel %vm435, %v612, 0
      %v619 = vsel %vm439, %v613, 0
      %v622 = vsel %vm439, %v614, 0
      %624 = vmatprep.subr.bf16.mxu0 0
      %625 = vmatpush1.bf16.msra.mxu0 0
      %626 = vmatprep.subr.bf16.mxu0 0
      %627 = vmatpush1.bf16.msra.mxu0 0
      %628 = vmatprep.subr.bf16.mxu0 0
      %629 = vmatpush1.bf16.msra.mxu0 0
      %630 = vmatprep.subr.bf16.mxu0 0
      %631 = vmatpush1.bf16.msra.mxu0 0
      %632 = vmatprep.subr.bf16.mxu0 0
      %633 = vmatpush1.bf16.msra.mxu0 0
      %634 = vmatprep.subr.bf16.mxu0 0
      %635 = vmatpush1.bf16.msra.mxu0 0
      %636 = vmatprep.subr.bf16.mxu0 0
      %637 = vmatpush1.bf16.msra.mxu0 0
      %638 = vmatprep.subr.bf16.mxu0 %v622
      %639 = vmatpush1.bf16.msra.mxu0 %v619
      %640 = vmatprep.subr.bf16.mxu0 0
      %641 = vmatpush2.bf16.msra.mxu0 0
      %642 = vmatprep.subr.bf16.mxu0 0
      %643 = vmatpush2.bf16.msra.mxu0 0
      %644 = vmatprep.subr.bf16.mxu0 0
      %645 = vmatpush2.bf16.msra.mxu0 0
      %646 = vmatprep.subr.bf16.mxu0 0
      %647 = vmatpush2.bf16.msra.mxu0 0
      %648 = vmatprep.subr.bf16.mxu0 0
      %649 = vmatpush2.bf16.msra.mxu0 0
      %650 = vmatprep.subr.bf16.mxu0 0
      %651 = vmatpush2.bf16.msra.mxu0 0
      %652 = vmatprep.subr.bf16.mxu0 0
      %653 = vmatpush2.bf16.msra.mxu0 0
      %654 = vmatprep.subr.bf16.mxu0 0
      %655 = vmatpush2.bf16.msra.mxu0 0
      %656 = vmatprep.mubr.bf16.mxu0 0
      %657 = vmatmul.mubr.bf16.gmra.mxu0 %v616
      %v658 = vpop.f32.mrf.mxu0
      %v659 = vadd.f32 0.0, %v658
      %v660 = vpop.f32.mrf.mxu0
      %v661 = vadd.f32 0.0, %v660
      %v662 = vpop.f32.mrf.mxu0
      %v663 = vpop.f32.mrf.mxu0
      %664 = vdwg.mxu0
      %v665 = vadd.f32 %v600, %v659
      %v666 = vadd.f32 %v601, %v661
      %s667 = scalar_lea.vmem %s2, 16
      %v668 = vld [vmem:[%s667] sm:$0xf]
      %v669 = vpack.c.bf16 %v325, %v325
      %v670 = vpack.c.bf16 %v326, %v326
      %v672 = vsel %vm435, %v668, 0
      %v675 = vsel %vm439, %v669, 0
      %v678 = vsel %vm439, %v670, 0
      %680 = vmatprep.subr.bf16.mxu0 0
      %681 = vmatpush1.bf16.msra.mxu0 0
      %682 = vmatprep.subr.bf16.mxu0 0
      %683 = vmatpush1.bf16.msra.mxu0 0
      %684 = vmatprep.subr.bf16.mxu0 0
      %685 = vmatpush1.bf16.msra.mxu0 0
      %686 = vmatprep.subr.bf16.mxu0 0
      %687 = vmatpush1.bf16.msra.mxu0 0
      %688 = vmatprep.subr.bf16.mxu0 0
      %689 = vmatpush1.bf16.msra.mxu0 0
      %690 = vmatprep.subr.bf16.mxu0 0
      %691 = vmatpush1.bf16.msra.mxu0 0
      %692 = vmatprep.subr.bf16.mxu0 0
      %693 = vmatpush1.bf16.msra.mxu0 0
      %694 = vmatprep.subr.bf16.mxu0 %v678
      %695 = vmatpush1.bf16.msra.mxu0 %v675
      %696 = vmatprep.subr.bf16.mxu0 0
      %697 = vmatpush2.bf16.msra.mxu0 0
      %698 = vmatprep.subr.bf16.mxu0 0
      %699 = vmatpush2.bf16.msra.mxu0 0
      %700 = vmatprep.subr.bf16.mxu0 0
      %701 = vmatpush2.bf16.msra.mxu0 0
      %702 = vmatprep.subr.bf16.mxu0 0
      %703 = vmatpush2.bf16.msra.mxu0 0
      %704 = vmatprep.subr.bf16.mxu0 0
      %705 = vmatpush2.bf16.msra.mxu0 0
      %706 = vmatprep.subr.bf16.mxu0 0
      %707 = vmatpush2.bf16.msra.mxu0 0
      %708 = vmatprep.subr.bf16.mxu0 0
      %709 = vmatpush2.bf16.msra.mxu0 0
      %710 = vmatprep.subr.bf16.mxu0 0
      %711 = vmatpush2.bf16.msra.mxu0 0
      %712 = vmatprep.mubr.bf16.mxu0 0
      %713 = vmatmul.mubr.bf16.gmra.mxu0 %v672
      %v714 = vpop.f32.mrf.mxu0
      %v715 = vadd.f32 0.0, %v714
      %v716 = vpop.f32.mrf.mxu0
      %v717 = vadd.f32 0.0, %v716
      %v718 = vpop.f32.mrf.mxu0
      %v719 = vpop.f32.mrf.mxu0
      %720 = vdwg.mxu0
      %v721 = vadd.f32 %v665, %v715
      %v722 = vadd.f32 %v666, %v717
      %723 = vrot.lane.b32.xlu0 %v325, 127
      %v724 = vpop.permute.xlu0 %723
      %725 = vrot.lane.b32.xlu0 %v326, 127
      %v726 = vpop.permute.xlu0 %725
      %vm727 = vcmp.lt.s32.totalorder %v328, 127
      %v728 = vsel %vm727, %v724, %v726
      %v729 = vsel %vm727, %v726, %v724
      %v730 = vmul.f32 %v728, %v400
      %v731 = vmul.f32 %v729, %v401
      %s732 = scalar_lea.vmem %s2, 20
      %v733 = vld [vmem:[%s732] sm:$0xf]
      %v734 = vpack.c.bf16 %v730, %v730
      %v735 = vpack.c.bf16 %v731, %v731
      %v737 = vsel %vm435, %v733, 0
      %v740 = vsel %vm439, %v734, 0
      %v743 = vsel %vm439, %v735, 0
      %745 = vmatprep.subr.bf16.mxu0 0
      %746 = vmatpush1.bf16.msra.mxu0 0
      %747 = vmatprep.subr.bf16.mxu0 0
      %748 = vmatpush1.bf16.msra.mxu0 0
      %749 = vmatprep.subr.bf16.mxu0 0
      %750 = vmatpush1.bf16.msra.mxu0 0
      %751 = vmatprep.subr.bf16.mxu0 0
      %752 = vmatpush1.bf16.msra.mxu0 0
      %753 = vmatprep.subr.bf16.mxu0 0
      %754 = vmatpush1.bf16.msra.mxu0 0
      %755 = vmatprep.subr.bf16.mxu0 0
      %756 = vmatpush1.bf16.msra.mxu0 0
      %757 = vmatprep.subr.bf16.mxu0 0
      %758 = vmatpush1.bf16.msra.mxu0 0
      %759 = vmatprep.subr.bf16.mxu0 %v743
      %760 = vmatpush1.bf16.msra.mxu0 %v740
      %761 = vmatprep.subr.bf16.mxu0 0
      %762 = vmatpush2.bf16.msra.mxu0 0
      %763 = vmatprep.subr.bf16.mxu0 0
      %764 = vmatpush2.bf16.msra.mxu0 0
      %765 = vmatprep.subr.bf16.mxu0 0
      %766 = vmatpush2.bf16.msra.mxu0 0
      %767 = vmatprep.subr.bf16.mxu0 0
      %768 = vmatpush2.bf16.msra.mxu0 0
      %769 = vmatprep.subr.bf16.mxu0 0
      %770 = vmatpush2.bf16.msra.mxu0 0
      %771 = vmatprep.subr.bf16.mxu0 0
      %772 = vmatpush2.bf16.msra.mxu0 0
      %773 = vmatprep.subr.bf16.mxu0 0
      %774 = vmatpush2.bf16.msra.mxu0 0
      %775 = vmatprep.subr.bf16.mxu0 0
      %776 = vmatpush2.bf16.msra.mxu0 0
      %777 = vmatprep.mubr.bf16.mxu0 0
      %778 = vmatmul.mubr.bf16.gmra.mxu0 %v737
      %v779 = vpop.f32.mrf.mxu0
      %v780 = vadd.f32 0.0, %v779
      %v781 = vpop.f32.mrf.mxu0
      %v782 = vadd.f32 0.0, %v781
      %v783 = vpop.f32.mrf.mxu0
      %v784 = vpop.f32.mrf.mxu0
      %785 = vdwg.mxu0
      %v786 = vadd.f32 %v721, %v780
      %v787 = vadd.f32 %v722, %v782
      %788 = vrot.lane.b32.xlu0 %v325, 113
      %v789 = vpop.permute.xlu0 %788
      %790 = vrot.lane.b32.xlu0 %v326, 113
      %v791 = vpop.permute.xlu0 %790
      %vm792 = vcmp.lt.s32.totalorder %v328, 113
      %v793 = vsel %vm792, %v789, %v791
      %v794 = vsel %vm792, %v791, %v789
      %v795 = vmul.f32 %v793, %v406
      %v796 = vmul.f32 %v794, %v407
      %s797 = scalar_lea.vmem %s2, 24
      %v798 = vld [vmem:[%s797] sm:$0xf]
      %v799 = vpack.c.bf16 %v795, %v795
      %v800 = vpack.c.bf16 %v796, %v796
      %v802 = vsel %vm435, %v798, 0
      %v805 = vsel %vm439, %v799, 0
      %v808 = vsel %vm439, %v800, 0
      %810 = vmatprep.subr.bf16.mxu0 0
      %811 = vmatpush1.bf16.msra.mxu0 0
      %812 = vmatprep.subr.bf16.mxu0 0
      %813 = vmatpush1.bf16.msra.mxu0 0
      %814 = vmatprep.subr.bf16.mxu0 0
      %815 = vmatpush1.bf16.msra.mxu0 0
      %816 = vmatprep.subr.bf16.mxu0 0
      %817 = vmatpush1.bf16.msra.mxu0 0
      %818 = vmatprep.subr.bf16.mxu0 0
      %819 = vmatpush1.bf16.msra.mxu0 0
      %820 = vmatprep.subr.bf16.mxu0 0
      %821 = vmatpush1.bf16.msra.mxu0 0
      %822 = vmatprep.subr.bf16.mxu0 0
      %823 = vmatpush1.bf16.msra.mxu0 0
      %824 = vmatprep.subr.bf16.mxu0 %v808
      %825 = vmatpush1.bf16.msra.mxu0 %v805
      %826 = vmatprep.subr.bf16.mxu0 0
      %827 = vmatpush2.bf16.msra.mxu0 0
      %828 = vmatprep.subr.bf16.mxu0 0
      %829 = vmatpush2.bf16.msra.mxu0 0
      %830 = vmatprep.subr.bf16.mxu0 0
      %831 = vmatpush2.bf16.msra.mxu0 0
      %832 = vmatprep.subr.bf16.mxu0 0
      %833 = vmatpush2.bf16.msra.mxu0 0
      %834 = vmatprep.subr.bf16.mxu0 0
      %835 = vmatpush2.bf16.msra.mxu0 0
      %836 = vmatprep.subr.bf16.mxu0 0
      %837 = vmatpush2.bf16.msra.mxu0 0
      %838 = vmatprep.subr.bf16.mxu0 0
      %839 = vmatpush2.bf16.msra.mxu0 0
      %840 = vmatprep.subr.bf16.mxu0 0
      %841 = vmatpush2.bf16.msra.mxu0 0
      %842 = vmatprep.mubr.bf16.mxu0 0
      %843 = vmatmul.mubr.bf16.gmra.mxu0 %v802
      %v844 = vpop.f32.mrf.mxu0
      %v845 = vadd.f32 0.0, %v844
      %v846 = vpop.f32.mrf.mxu0
      %v847 = vadd.f32 0.0, %v846
      %v848 = vpop.f32.mrf.mxu0
      %v849 = vpop.f32.mrf.mxu0
      %850 = vdwg.mxu0
      %v851 = vadd.f32 %v786, %v845
      %v852 = vadd.f32 %v787, %v847
      %853 = vrot.lane.b32.xlu0 %v325, 112
      %v854 = vpop.permute.xlu0 %853
      %855 = vrot.lane.b32.xlu0 %v326, 112
      %v856 = vpop.permute.xlu0 %855
      %vm857 = vcmp.lt.s32.totalorder %v328, 112
      %v858 = vsel %vm857, %v854, %v856
      %v859 = vsel %vm857, %v856, %v854
      %v860 = vmul.f32 %v858, %v388
      %v861 = vmul.f32 %v859, %v389
      %s862 = scalar_lea.vmem %s2, 28
      %v863 = vld [vmem:[%s862] sm:$0xf]
      %v864 = vpack.c.bf16 %v860, %v860
      %v865 = vpack.c.bf16 %v861, %v861
      %v867 = vsel %vm435, %v863, 0
      %v870 = vsel %vm439, %v864, 0
      %v873 = vsel %vm439, %v865, 0
      %875 = vmatprep.subr.bf16.mxu0 0
      %876 = vmatpush1.bf16.msra.mxu0 0
      %877 = vmatprep.subr.bf16.mxu0 0
      %878 = vmatpush1.bf16.msra.mxu0 0
      %879 = vmatprep.subr.bf16.mxu0 0
      %880 = vmatpush1.bf16.msra.mxu0 0
      %881 = vmatprep.subr.bf16.mxu0 0
      %882 = vmatpush1.bf16.msra.mxu0 0
      %883 = vmatprep.subr.bf16.mxu0 0
      %884 = vmatpush1.bf16.msra.mxu0 0
      %885 = vmatprep.subr.bf16.mxu0 0
      %886 = vmatpush1.bf16.msra.mxu0 0
      %887 = vmatprep.subr.bf16.mxu0 0
      %888 = vmatpush1.bf16.msra.mxu0 0
      %889 = vmatprep.subr.bf16.mxu0 %v873
      %890 = vmatpush1.bf16.msra.mxu0 %v870
      %891 = vmatprep.subr.bf16.mxu0 0
      %892 = vmatpush2.bf16.msra.mxu0 0
      %893 = vmatprep.subr.bf16.mxu0 0
      %894 = vmatpush2.bf16.msra.mxu0 0
      %895 = vmatprep.subr.bf16.mxu0 0
      %896 = vmatpush2.bf16.msra.mxu0 0
      %897 = vmatprep.subr.bf16.mxu0 0
      %898 = vmatpush2.bf16.msra.mxu0 0
      %899 = vmatprep.subr.bf16.mxu0 0
      %900 = vmatpush2.bf16.msra.mxu0 0
      %901 = vmatprep.subr.bf16.mxu0 0
      %902 = vmatpush2.bf16.msra.mxu0 0
      %903 = vmatprep.subr.bf16.mxu0 0
      %904 = vmatpush2.bf16.msra.mxu0 0
      %905 = vmatprep.subr.bf16.mxu0 0
      %906 = vmatpush2.bf16.msra.mxu0 0
      %907 = vmatprep.mubr.bf16.mxu0 0
      %908 = vmatmul.mubr.bf16.gmra.mxu0 %v867
      %v909 = vpop.f32.mrf.mxu0
      %v910 = vadd.f32 0.0, %v909
      %v911 = vpop.f32.mrf.mxu0
      %v912 = vadd.f32 0.0, %v911
      %v913 = vpop.f32.mrf.mxu0
      %v914 = vpop.f32.mrf.mxu0
      %915 = vdwg.mxu0
      %v916 = vadd.f32 %v851, %v910
      %v917 = vadd.f32 %v852, %v912
      %918 = vrot.lane.b32.xlu0 %v325, 111
      %v919 = vpop.permute.xlu0 %918
      %920 = vrot.lane.b32.xlu0 %v326, 111
      %v921 = vpop.permute.xlu0 %920
      %vm922 = vcmp.lt.s32.totalorder %v328, 111
      %v923 = vsel %vm922, %v919, %v921
      %v924 = vsel %vm922, %v921, %v919
      %v925 = vmul.f32 %v923, %v408
      %v926 = vmul.f32 %v924, %v409
      %s927 = scalar_lea.vmem %s2, 32
      %v928 = vld [vmem:[%s927] sm:$0xf]
      %v929 = vpack.c.bf16 %v925, %v925
      %v930 = vpack.c.bf16 %v926, %v926
      %v932 = vsel %vm435, %v928, 0
      %v935 = vsel %vm439, %v929, 0
      %v938 = vsel %vm439, %v930, 0
      %940 = vmatprep.subr.bf16.mxu0 0
      %941 = vmatpush1.bf16.msra.mxu0 0
      %942 = vmatprep.subr.bf16.mxu0 0
      %943 = vmatpush1.bf16.msra.mxu0 0
      %944 = vmatprep.subr.bf16.mxu0 0
      %945 = vmatpush1.bf16.msra.mxu0 0
      %946 = vmatprep.subr.bf16.mxu0 0
      %947 = vmatpush1.bf16.msra.mxu0 0
      %948 = vmatprep.subr.bf16.mxu0 0
      %949 = vmatpush1.bf16.msra.mxu0 0
      %950 = vmatprep.subr.bf16.mxu0 0
      %951 = vmatpush1.bf16.msra.mxu0 0
      %952 = vmatprep.subr.bf16.mxu0 0
      %953 = vmatpush1.bf16.msra.mxu0 0
      %954 = vmatprep.subr.bf16.mxu0 %v938
      %955 = vmatpush1.bf16.msra.mxu0 %v935
      %956 = vmatprep.subr.bf16.mxu0 0
      %957 = vmatpush2.bf16.msra.mxu0 0
      %958 = vmatprep.subr.bf16.mxu0 0
      %959 = vmatpush2.bf16.msra.mxu0 0
      %960 = vmatprep.subr.bf16.mxu0 0
      %961 = vmatpush2.bf16.msra.mxu0 0
      %962 = vmatprep.subr.bf16.mxu0 0
      %963 = vmatpush2.bf16.msra.mxu0 0
      %964 = vmatprep.subr.bf16.mxu0 0
      %965 = vmatpush2.bf16.msra.mxu0 0
      %966 = vmatprep.subr.bf16.mxu0 0
      %967 = vmatpush2.bf16.msra.mxu0 0
      %968 = vmatprep.subr.bf16.mxu0 0
      %969 = vmatpush2.bf16.msra.mxu0 0
      %970 = vmatprep.subr.bf16.mxu0 0
      %971 = vmatpush2.bf16.msra.mxu0 0
      %972 = vmatprep.mubr.bf16.mxu0 0
      %973 = vmatmul.mubr.bf16.gmra.mxu0 %v932
      %v974 = vpop.f32.mrf.mxu0
      %v975 = vadd.f32 0.0, %v974
      %v976 = vpop.f32.mrf.mxu0
      %v977 = vadd.f32 0.0, %v976
      %v978 = vpop.f32.mrf.mxu0
      %v979 = vpop.f32.mrf.mxu0
      %980 = vdwg.mxu0
      %v981 = vadd.f32 %v916, %v975
      %v982 = vadd.f32 %v917, %v977
      %v983 = vld [vmem:[%s3] sm:$0xf]
      %v984 = vld [vmem:[%s296] sm:$0xff]
      %v985 = vld [vmem:[%s296 + $0x8] sm:$0xff]
      %v986 = vpack.c.bf16 %v984, %v984
      %v987 = vpack.c.bf16 %v985, %v985
      %v988 = vld [vmem:[%s4] sm:$0xff]
      %990 = vset.pattern.permute.xlu0 0
      %991 = vperm.xlu0 %990, %v988
      %v992 = vpop.permute.xlu0 %991
      %v995 = vsel %vm435, %v983, 0
      %v998 = vsel %vm439, %v986, 0
      %v1001 = vsel %vm439, %v987, 0
      %1003 = vmatprep.subr.bf16.mxu0 0
      %1004 = vmatpush1.bf16.msra.mxu0 0
      %1005 = vmatprep.subr.bf16.mxu0 0
      %1006 = vmatpush1.bf16.msra.mxu0 0
      %1007 = vmatprep.subr.bf16.mxu0 0
      %1008 = vmatpush1.bf16.msra.mxu0 0
      %1009 = vmatprep.subr.bf16.mxu0 0
      %1010 = vmatpush1.bf16.msra.mxu0 0
      %1011 = vmatprep.subr.bf16.mxu0 0
      %1012 = vmatpush1.bf16.msra.mxu0 0
      %1013 = vmatprep.subr.bf16.mxu0 0
      %1014 = vmatpush1.bf16.msra.mxu0 0
      %1015 = vmatprep.subr.bf16.mxu0 0
      %1016 = vmatpush1.bf16.msra.mxu0 0
      %1017 = vmatprep.subr.bf16.mxu0 %v1001
      %1018 = vmatpush1.bf16.msra.mxu0 %v998
      %1019 = vmatprep.subr.bf16.mxu0 0
      %1020 = vmatpush2.bf16.msra.mxu0 0
      %1021 = vmatprep.subr.bf16.mxu0 0
      %1022 = vmatpush2.bf16.msra.mxu0 0
      %1023 = vmatprep.subr.bf16.mxu0 0
      %1024 = vmatpush2.bf16.msra.mxu0 0
      %1025 = vmatprep.subr.bf16.mxu0 0
      %1026 = vmatpush2.bf16.msra.mxu0 0
      %1027 = vmatprep.subr.bf16.mxu0 0
      %1028 = vmatpush2.bf16.msra.mxu0 0
      %1029 = vmatprep.subr.bf16.mxu0 0
      %1030 = vmatpush2.bf16.msra.mxu0 0
      %1031 = vmatprep.subr.bf16.mxu0 0
      %1032 = vmatpush2.bf16.msra.mxu0 0
      %1033 = vmatprep.subr.bf16.mxu0 0
      %1034 = vmatpush2.bf16.msra.mxu0 0
      %1035 = vmatprep.mubr.bf16.mxu0 0
      %1036 = vmatmul.mubr.bf16.gmra.mxu0 %v995
      %v1037 = vpop.f32.mrf.mxu0
      %v1038 = vadd.f32 %v992, %v1037
      %v1039 = vpop.f32.mrf.mxu0
      %v1040 = vadd.f32 %v992, %v1039
      %v1041 = vpop.f32.mrf.mxu0
      %v1042 = vpop.f32.mrf.mxu0
      %1043 = vdwg.mxu0
      %v1044 = vadd.f32 %v981, %v1038
      %v1045 = vadd.f32 %v982, %v1040
      %1046 = vst [vmem:[%s302] sm:$0xff] %v1044
      %1047 = vst [vmem:[%s302 + $0x8] sm:$0xff] %v1045
      %s1048 = smul.u32 2, %s18
      %p1049 = scmp.lt.s32.totalorder %s1048, 3
      %s1050 = scalar_select %p1049, %s1048, 3
      %s1051 = smul.addr %s1050, 8
      %s1052 = scalar_lea.vmem %s7, %s1051
      // Predicated region
      $region49: #{resblock_forward.7} parent=47 // pred_check
        %p1053 = pneg %p193
      $region50: #{resblock_forward.7} parent=47 // pred_check_branch
        %1055 = sbr.rel (%p1053) target = $region52
      $region51: #{resblock_forward.7} parent=47 // pred_region
        %s1056 = smul.u32 2, %s18
      $region52: #{resblock_forward.7} parent=47 // pred_fallthru
        _
    $region48: #{resblock_forward.7} parent=5 // pred_fallthru
      _
    %p1057 = scmp.le.s32.totalorder 2, %s13
    // Predicated region
    $region53: #{resblock_forward.7} parent=5 // pred_check
      %p1058 = pneg %p1057
    $region54: #{resblock_forward.7} parent=5 // pred_check_branch
      %1060 = sbr.rel (%p1058) target = $region56
    $region55: #{resblock_forward.7} parent=5 // pred_region
      %s1061 = ssub.s32 %s13, 2
      // Predicated region
      $region57: #{resblock_forward.7} parent=55 // pred_check
        %p1062 = pneg %p199
      $region58: #{resblock_forward.7} parent=55 // pred_check_branch
        %1064 = sbr.rel (%p1062) target = $region60
      $region59: #{resblock_forward.7} parent=55 // pred_region
        %s1065 = smul.u32 2, %s19
        %p1066 = scmp.lt.s32.totalorder %s1065, 3
        %s1067 = scalar_select %p1066, %s1065, 3
        %s1068 = smul.addr %s1067, 8
        %s1069 = scalar_lea.vmem %s7, %s1068
      $region60: #{resblock_forward.7} parent=55 // pred_fallthru
        _
    $region56: #{resblock_forward.7} parent=5 // pred_fallthru
      _
  $region6: #{resblock_forward.7} parent=0 // loop_footer
    %s17 = sadd.s32 1, %s13
  $region7: #{resblock_forward.7} parent=0 // loop_footer_branch
    %12 = sbr.rel target = $region3
  $region8: #{resblock_forward.7} parent=0 // loop_exit
    _

// kernel: resblock_forward.5
$region0: #{resblock_forward.5}
  #allocation0 [shape = 'u32[]', space=smem, size = 0x4, offset = 0x4, fixed_abs, tag = 'smem constant byte address 0x4 - core index']
  #allocation1 [shape = 'u32[144,128]{1,0:T(1,128)}', space=vmem, size = 0x12000, scoped, tag = 'internal scratch']
  %s0 = inlined_call_operand.vmem [shape: f32[8,1], index: 0, kind: input, shape index: {}]
  %s1 = inlined_call_operand.vmem [shape: f32[8,1], index: 1, kind: input, shape index: {}]
  %s2 = inlined_call_operand.vmem [shape: bf16[9,8,8], index: 2, kind: input, shape index: {}]
  %s3 = inlined_call_operand.vmem [shape: f32[8,512], index: 3, kind: input, shape index: {}]
  %s4 = inlined_call_operand.vmem [shape: f32[8,512], index: 4, kind: output, shape index: {0}]
  %s5 = inlined_call_operand.vmem [shape: f32[2,8,1], index: 5, kind: output, shape index: {1}]
  %s6 = inlined_call_operand.vmem [shape: f32[2,8,1], index: 6, kind: output, shape index: {2}]
  %7 = xla_tuple %s4, %s5, %s6
  %s8 = sld [smem:[#allocation0]]
  $region65: #{resblock_forward.5} parent=0
    _
  %s10 = ssub.s32 1, %s8
  %s11 = scalar_select 0, %s10, %s8
  loop: start=0, step=1, limit=4
  $region2: #{resblock_forward.5} parent=0 // loop_pre_header
    _
  $region3: #{resblock_forward.5} parent=0 // loop_header
    %s13 = sphi 0, %s17
    %p14 = scmp.ge.s32.totalorder %s13, 4
    %s21 = sphi 0, %s21
    %s23 = sphi 0, %s21
    %s24 = sphi 0, %s23
    %s38 = sphi 0, %s24
    %s42 = sphi 0, %s42
    %s44 = sphi 0, %s42
    %s45 = sphi 0, %s44
    %s59 = sphi 0, %s45
    %s63 = sphi 0, %s63
    %s65 = sphi 0, %s63
    %s66 = sphi 0, %s65
    %s80 = sphi 0, %s66
    %s86 = sphi 0, %s88
    %s89 = sphi 0, %s86
    %s90 = sphi 0, %s89
    %s106 = sphi 0, %s90
    %s112 = sphi 0, %s114
    %s115 = sphi 0, %s112
    %s116 = sphi 0, %s115
    %s132 = sphi 0, %s116
    %s138 = sphi 0, %s140
    %s141 = sphi 0, %s138
    %s142 = sphi 0, %s141
    %s158 = sphi 0, %s142
    %s164 = sphi 0, %s166
    %s167 = sphi 0, %s164
    %s168 = sphi 0, %s167
    %s184 = sphi 0, %s168
  $region4: #{resblock_forward.5} parent=0 // loop_header_branch
    %16 = sbr.rel (%p14) target = $region8
  $region5: #{resblock_forward.5} parent=0 // loop_body
    %s18 = ssub.s32 %s13, 1
    %s19 = ssub.s32 %s13, 2
    %s20 = sadd.s32 %s13, 1
    %s22 = sadd.s32 %s21, 1
    %p25 = scmp.eq.s32.totalorder %s13, 1
    %p26 = scmp.ne.s32.totalorder %s21, %s23
    %p27 = scmp.eq.s32.totalorder %s13, 0
    %p28 = por %p26, %p27
    %p29 = scmp.ne.s32.totalorder %s21, %s23
    %p30 = scmp.eq.s32.totalorder %s18, 1
    %p31 = por %p29, %p30
    %p32 = scmp.ne.s32.totalorder %s23, %s24
    %p33 = scmp.eq.s32.totalorder %s18, 0
    %p34 = por %p32, %p33
    %p35 = scmp.ne.s32.totalorder %s23, %s24
    %p36 = scmp.eq.s32.totalorder %s19, 1
    %p37 = por %p35, %p36
    %p39 = scmp.ne.s32.totalorder %s24, %s38
    %p40 = scmp.eq.s32.totalorder %s19, 0
    %p41 = por %p39, %p40
    %s43 = sadd.s32 %s42, 1
    %p46 = scmp.eq.s32.totalorder %s13, 1
    %p47 = scmp.ne.s32.totalorder %s42, %s44
    %p48 = scmp.eq.s32.totalorder %s13, 0
    %p49 = por %p47, %p48
    %p50 = scmp.ne.s32.totalorder %s42, %s44
    %p51 = scmp.eq.s32.totalorder %s18, 1
    %p52 = por %p50, %p51
    %p53 = scmp.ne.s32.totalorder %s44, %s45
    %p54 = scmp.eq.s32.totalorder %s18, 0
    %p55 = por %p53, %p54
    %p56 = scmp.ne.s32.totalorder %s44, %s45
    %p57 = scmp.eq.s32.totalorder %s19, 1
    %p58 = por %p56, %p57
    %p60 = scmp.ne.s32.totalorder %s45, %s59
    %p61 = scmp.eq.s32.totalorder %s19, 0
    %p62 = por %p60, %p61
    %s64 = sadd.s32 %s63, 1
    %p67 = scmp.eq.s32.totalorder %s13, 1
    %p68 = scmp.ne.s32.totalorder %s63, %s65
    %p69 = scmp.eq.s32.totalorder %s13, 0
    %p70 = por %p68, %p69
    %p71 = scmp.ne.s32.totalorder %s63, %s65
    %p72 = scmp.eq.s32.totalorder %s18, 1
    %p73 = por %p71, %p72
    %p74 = scmp.ne.s32.totalorder %s65, %s66
    %p75 = scmp.eq.s32.totalorder %s18, 0
    %p76 = por %p74, %p75
    %p77 = scmp.ne.s32.totalorder %s65, %s66
    %p78 = scmp.eq.s32.totalorder %s19, 1
    %p79 = por %p77, %p78
    %p81 = scmp.ne.s32.totalorder %s66, %s80
    %p82 = scmp.eq.s32.totalorder %s19, 0
    %p83 = por %p81, %p82
    %s84 = ssub.s32 %s13, %s20
    %p85 = scmp.eq.s32.totalorder %s84, 0
    %s87 = sadd.s32 %s86, 1
    %s88 = scalar_select %p85, %s86, %s87
    %p91 = pneg %p85
    %p92 = scmp.eq.s32.totalorder %s13, 1
    %p93 = por %p91, %p92
    %p94 = scmp.ne.s32.totalorder %s86, %s89
    %p95 = scmp.eq.s32.totalorder %s13, 0
    %p96 = por %p94, %p95
    %p97 = scmp.ne.s32.totalorder %s86, %s89
    %p98 = scmp.eq.s32.totalorder %s18, 1
    %p99 = por %p97, %p98
    %p100 = scmp.ne.s32.totalorder %s89, %s90
    %p101 = scmp.eq.s32.totalorder %s18, 0
    %p102 = por %p100, %p101
    %p103 = scmp.ne.s32.totalorder %s89, %s90
    %p104 = scmp.eq.s32.totalorder %s19, 1
    %p105 = por %p103, %p104
    %p107 = scmp.ne.s32.totalorder %s90, %s106
    %p108 = scmp.eq.s32.totalorder %s19, 0
    %p109 = por %p107, %p108
    %s110 = ssub.s32 %s13, %s20
    %p111 = scmp.eq.s32.totalorder %s110, 0
    %s113 = sadd.s32 %s112, 1
    %s114 = scalar_select %p111, %s112, %s113
    %p117 = pneg %p111
    %p118 = scmp.eq.s32.totalorder %s13, 1
    %p119 = por %p117, %p118
    %p120 = scmp.ne.s32.totalorder %s112, %s115
    %p121 = scmp.eq.s32.totalorder %s13, 0
    %p122 = por %p120, %p121
    %p123 = scmp.ne.s32.totalorder %s112, %s115
    %p124 = scmp.eq.s32.totalorder %s18, 1
    %p125 = por %p123, %p124
    %p126 = scmp.ne.s32.totalorder %s115, %s116
    %p127 = scmp.eq.s32.totalorder %s18, 0
    %p128 = por %p126, %p127
    %p129 = scmp.ne.s32.totalorder %s115, %s116
    %p130 = scmp.eq.s32.totalorder %s19, 1
    %p131 = por %p129, %p130
    %p133 = scmp.ne.s32.totalorder %s116, %s132
    %p134 = scmp.eq.s32.totalorder %s19, 0
    %p135 = por %p133, %p134
    %s136 = ssub.s32 %s13, %s20
    %p137 = scmp.eq.s32.totalorder %s136, 0
    %s139 = sadd.s32 %s138, 1
    %s140 = scalar_select %p137, %s138, %s139
    %p143 = pneg %p137
    %p144 = scmp.eq.s32.totalorder %s13, 1
    %p145 = por %p143, %p144
    %p146 = scmp.ne.s32.totalorder %s138, %s141
    %p147 = scmp.eq.s32.totalorder %s13, 0
    %p148 = por %p146, %p147
    %p149 = scmp.ne.s32.totalorder %s138, %s141
    %p150 = scmp.eq.s32.totalorder %s18, 1
    %p151 = por %p149, %p150
    %p152 = scmp.ne.s32.totalorder %s141, %s142
    %p153 = scmp.eq.s32.totalorder %s18, 0
    %p154 = por %p152, %p153
    %p155 = scmp.ne.s32.totalorder %s141, %s142
    %p156 = scmp.eq.s32.totalorder %s19, 1
    %p157 = por %p155, %p156
    %p159 = scmp.ne.s32.totalorder %s142, %s158
    %p160 = scmp.eq.s32.totalorder %s19, 0
    %p161 = por %p159, %p160
    %s162 = ssub.s32 %s13, %s20
    %p163 = scmp.eq.s32.totalorder %s162, 0
    %s165 = sadd.s32 %s164, 1
    %s166 = scalar_select %p163, %s164, %s165
    %p169 = pneg %p163
    %p170 = scmp.eq.s32.totalorder %s13, 1
    %p171 = por %p169, %p170
    %p172 = scmp.ne.s32.totalorder %s164, %s167
    %p173 = scmp.eq.s32.totalorder %s13, 0
    %p174 = por %p172, %p173
    %p175 = scmp.ne.s32.totalorder %s164, %s167
    %p176 = scmp.eq.s32.totalorder %s18, 1
    %p177 = por %p175, %p176
    %p178 = scmp.ne.s32.totalorder %s167, %s168
    %p179 = scmp.eq.s32.totalorder %s18, 0
    %p180 = por %p178, %p179
    %p181 = scmp.ne.s32.totalorder %s167, %s168
    %p182 = scmp.eq.s32.totalorder %s19, 1
    %p183 = por %p181, %p182
    %p185 = scmp.ne.s32.totalorder %s168, %s184
    %p186 = scmp.eq.s32.totalorder %s19, 0
    %p187 = por %p185, %p186
    %p188 = scmp.le.s32.totalorder 1, %s13
    %p189 = scmp.lt.s32.totalorder %s13, 3
    %p190 = pnand %p188, %p189
    %p191 = pneg %p190
    // Predicated region
    $region9: #{resblock_forward.5} parent=5 // pred_check
      _
    $region10: #{resblock_forward.5} parent=5 // pred_check_branch
      %193 = sbr.rel (%p190) target = $region12
    $region11: #{resblock_forward.5} parent=5 // pred_region
      %s194 = ssub.s32 %s13, 1
      // Predicated region
      $region13: #{resblock_forward.5} parent=11 // pred_check
        %p195 = pneg %p34
      $region14: #{resblock_forward.5} parent=11 // pred_check_branch
        %197 = sbr.rel (%p195) target = $region16
      $region15: #{resblock_forward.5} parent=11 // pred_region
        _
      $region16: #{resblock_forward.5} parent=11 // pred_fallthru
        _
      // Predicated region
      $region17: #{resblock_forward.5} parent=11 // pred_check
        %p198 = pneg %p55
      $region18: #{resblock_forward.5} parent=11 // pred_check_branch
        %200 = sbr.rel (%p198) target = $region20
      $region19: #{resblock_forward.5} parent=11 // pred_region
        _
      $region20: #{resblock_forward.5} parent=11 // pred_fallthru
        _
      // Predicated region
      $region21: #{resblock_forward.5} parent=11 // pred_check
        %p201 = pneg %p76
      $region22: #{resblock_forward.5} parent=11 // pred_check_branch
        %203 = sbr.rel (%p201) target = $region24
      $region23: #{resblock_forward.5} parent=11 // pred_region
        _
      $region24: #{resblock_forward.5} parent=11 // pred_fallthru
        _
    $region12: #{resblock_forward.5} parent=5 // pred_fallthru
      _
    %p204 = scmp.lt.s32.totalorder %s13, 2
    // Predicated region
    $region25: #{resblock_forward.5} parent=5 // pred_check
      %p205 = pneg %p204
    $region26: #{resblock_forward.5} parent=5 // pred_check_branch
      %207 = sbr.rel (%p205) target = $region28
    $region27: #{resblock_forward.5} parent=5 // pred_region
      // Predicated region
      $region29: #{resblock_forward.5} parent=27 // pred_check
        %p208 = pneg %p96
      $region30: #{resblock_forward.5} parent=27 // pred_check_branch
        %210 = sbr.rel (%p208) target = $region32
      $region31: #{resblock_forward.5} parent=27 // pred_region
        %s211 = smul.u32 2, %s13
        %p212 = scmp.lt.s32.totalorder %s211, 3
        %s213 = scalar_select %p212, %s211, 3
        %s214 = smul.addr %s213, 8
        %s215 = scalar_lea.vmem %s3, %s214
        %s216 = smul.u32 2, %s13
      $region32: #{resblock_forward.5} parent=27 // pred_fallthru
        _
    $region28: #{resblock_forward.5} parent=5 // pred_fallthru
      _
    %p217 = scmp.le.s32.totalorder 1, %s13
    %p218 = scmp.lt.s32.totalorder %s13, 3
    %p219 = pnand %p217, %p218
    %p220 = pneg %p219
    // Predicated region
    $region33: #{resblock_forward.5} parent=5 // pred_check
      _
    $region34: #{resblock_forward.5} parent=5 // pred_check_branch
      %222 = sbr.rel (%p219) target = $region36
    $region35: #{resblock_forward.5} parent=5 // pred_region
      %s223 = ssub.s32 %s13, 1
      %p224 = pneg %p34
      %p225 = pneg %p31
      %p226 = pneg %p55
      %p227 = pneg %p52
      %p228 = pneg %p76
      %p229 = pneg %p73
      %s230 = smul.u32 2, %s18
      %p231 = scmp.lt.s32.totalorder %s230, 3
      %s232 = scalar_select %p231, %s230, 3
      %s233 = smul.addr %s232, 8
      %s234 = scalar_lea.vmem %s3, %s233
      %p235 = pneg %p102
      %p236 = pneg %p99
      %p237 = pneg %p128
      %p238 = pneg %p125
      %s239 = smul.u32 2, %s18
      %p240 = scmp.lt.s32.totalorder %s239, 3
      %s241 = scalar_select %p240, %s239, 3
      %s242 = smul.addr %s241, 8
      %s243 = scalar_lea.vmem %s4, %s242
      %p244 = pneg %p154
      %p245 = pneg %p151
      %p246 = scmp.lt.s32.totalorder %s18, 1
      %s247 = scalar_select %p246, %s18, 1
      %s248 = smul.addr %s247, 8
      %s249 = scalar_lea.vmem %s5, %s248
      %p250 = pneg %p180
      %p251 = pneg %p177
      %p252 = scmp.lt.s32.totalorder %s18, 1
      %s253 = scalar_select %p252, %s18, 1
      %s254 = smul.addr %s253, 8
      %s255 = scalar_lea.vmem %s6, %s254
      %s256 = smul.u32 2, %s18
      %p257 = scmp.lt.s32.totalorder %s256, 3
      %s258 = scalar_select %p257, %s256, 3
      %s259 = smul.addr %s258, 8
      %s260 = scalar_lea.vmem %s3, %s259
      %s261 = smul.u32 2, %s18
      %s262 = smul.u32 2, %s18
      %p263 = scmp.lt.s32.totalorder %s262, 3
      %s264 = scalar_select %p263, %s262, 3
      %s265 = smul.addr %s264, 8
      %s266 = scalar_lea.vmem %s4, %s265
      %s267 = smul.u32 2, %s18
      %p268 = scmp.lt.s32.totalorder %s18, 1
      %s269 = scalar_select %p268, %s18, 1
      %s270 = smul.addr %s269, 8
      %s271 = scalar_lea.vmem %s5, %s270
      %p272 = scmp.lt.s32.totalorder %s18, 1
      %s273 = scalar_select %p272, %s18, 1
      %s274 = smul.addr %s273, 8
      %s275 = scalar_lea.vmem %s6, %s274
      %v277 = vld [vmem:[%s260] sm:$0xff]
      %v278 = vld [vmem:[%s260 + $0x8] sm:$0xff]
      %v279 = vld [vmem:[%s0] sm:$0xff]
      %v280 = vld [vmem:[%s1] sm:$0xff]
      %282 = vset.pattern.permute.xlu0 0
      %283 = vperm.xlu0 %282, %v279
      %v284 = vpop.permute.xlu0 %283
      %v286 = vmul.f32 %v277, %v284
      %v287 = vmul.f32 %v278, %v284
      %289 = vset.pattern.permute.xlu0 0
      %290 = vperm.xlu0 %289, %v280
      %v291 = vpop.permute.xlu0 %290
      %v293 = vadd.f32 %v286, %v291
      %v294 = vadd.f32 %v287, %v291
      %v295 = vmul.f32 %v293, 0.1
      %v296 = vmul.f32 %v294, 0.1
      %v297 = vmax.f32 %v293, %v295
      %v298 = vmax.f32 %v294, %v296
      %v299 = vlaneseq
      %v300 = vand.u32 %v299, 127
      %v301 = vadd.s32 %v300, 128
      %vm302 = vcmp.lt.s32.totalorder %v300, 0
      %v303 = vsub.s32 0, %v300
      %v304 = vsel %vm302, %v303, %v300
      %v305 = vshrl.u32 %v304, 8
      %v306 = vand.u32 %v304, 255
      %v307 = vsub.s32 0, %v306
      %v308 = vsel %vm302, %v307, %v306
      %vm309 = vcmp.lt.s32.totalorder %v301, 0
      %v310 = vsub.s32 0, %v301
      %v311 = vsel %vm309, %v310, %v301
      %v312 = vshrl.u32 %v311, 8
      %v313 = vand.u32 %v311, 255
      %v314 = vsub.s32 0, %v313
      %v315 = vsel %vm309, %v314, %v313
      %vm316 = vcmp.ne.s32.totalorder %v308, 0
      %vm317 = vcmp.ne.s32.totalorder %v315, 0
      %vm318 = vcmp.lt.s32.totalorder %v308, 0
      %vm319 = vcmp.lt.s32.totalorder %v315, 0
      %vm320 = vmand %vm318, %vm316
      %vm321 = vmand %vm319, %vm317
      %v322 = vadd.s32 %v308, 256
      %v323 = vadd.s32 %v315, 256
      %v324 = vsel %vm320, %v322, %v308
      %v325 = vsel %vm321, %v323, %v315
      %vm326 = vcmp.lt.s32.totalorder %v300, 0
      %v327 = vsub.s32 0, %v300
      %v328 = vsel %vm326, %v327, %v300
      %v329 = vshrl.u32 %v328, 4
      %v330 = vand.u32 %v328, 15
      %v331 = vsub.s32 0, %v330
      %v332 = vsel %vm326, %v331, %v330
      %vm333 = vcmp.lt.s32.totalorder %v301, 0
      %v334 = vsub.s32 0, %v301
      %v335 = vsel %vm333, %v334, %v301
      %v336 = vshrl.u32 %v335, 4
      %v337 = vand.u32 %v335, 15
      %v338 = vsub.s32 0, %v337
      %v339 = vsel %vm333, %v338, %v337
      %vm340 = vcmp.ne.s32.totalorder %v332, 0
      %vm341 = vcmp.ne.s32.totalorder %v339, 0
      %vm342 = vcmp.lt.s32.totalorder %v332, 0
      %vm343 = vcmp.lt.s32.totalorder %v339, 0
      %vm344 = vmand %vm342, %vm340
      %vm345 = vmand %vm343, %vm341
      %v346 = vadd.s32 %v332, 16
      %v347 = vadd.s32 %v339, 16
      %v348 = vsel %vm344, %v346, %v332
      %v349 = vsel %vm345, %v347, %v339
      %vm350 = vcmp.ge.s32.totalorder %v324, 16
      %vm351 = vcmp.ge.s32.totalorder %v325, 16
      %v352 = vsel %vm350, 1, 0
      %v353 = vsel %vm351, 1, 0
      %v354 = vcvt.s32.f32 %v352
      %v355 = vcvt.s32.f32 %v353
      %vm356 = vcmp.lt.s32.totalorder %v324, 240
      %vm357 = vcmp.lt.s32.totalorder %v325, 240
      %v358 = vsel %vm356, 1, 0
      %v359 = vsel %vm357, 1, 0
      %v360 = vcvt.s32.f32 %v358
      %v361 = vcvt.s32.f32 %v359
      %vm362 = vcmp.ge.s32.totalorder %v348, 1
      %vm363 = vcmp.ge.s32.totalorder %v349, 1
      %v364 = vsel %vm362, 1, 0
      %v365 = vsel %vm363, 1, 0
      %v366 = vcvt.s32.f32 %v364
      %v367 = vcvt.s32.f32 %v365
      %vm368 = vcmp.lt.s32.totalorder %v348, 15
      %vm369 = vcmp.lt.s32.totalorder %v349, 15
      %v370 = vsel %vm368, 1, 0
      %v371 = vsel %vm369, 1, 0
      %v372 = vcvt.s32.f32 %v370
      %v373 = vcvt.s32.f32 %v371
      %v374 = vmul.f32 %v354, %v366
      %v375 = vmul.f32 %v355, %v367
      %v376 = vmul.f32 %v354, %v372
      %v377 = vmul.f32 %v355, %v373
      %v378 = vmul.f32 %v360, %v366
      %v379 = vmul.f32 %v361, %v367
      %v380 = vmul.f32 %v360, %v372
      %v381 = vmul.f32 %v361, %v373
      %382 = vrot.lane.b32.xlu0 %v297, 17
      %v383 = vpop.permute.xlu0 %382
      %384 = vrot.lane.b32.xlu0 %v298, 17
      %v385 = vpop.permute.xlu0 %384
      %vm386 = vcmp.lt.s32.totalorder %v300, 17
      %v387 = vsel %vm386, %v383, %v385
      %v388 = vsel %vm386, %v385, %v383
      %v389 = vmul.f32 %v388, %v374
      %v390 = vmul.f32 %v387, %v375
      %v391 = vld [vmem:[%s2] sm:$0xf]
      %v392 = vpack.c.bf16 %v389, %v389
      %v393 = vpack.c.bf16 %v390, %v390
      %394 = vrot.lane.b32.xlu0 %v297, 16
      %v395 = vpop.permute.xlu0 %394
      %396 = vrot.lane.b32.xlu0 %v298, 16
      %v397 = vpop.permute.xlu0 %396
      %vm398 = vcmp.lt.s32.totalorder %v300, 16
      %v399 = vsel %vm398, %v395, %v397
      %v400 = vsel %vm398, %v397, %v395
      %v401 = vmul.f32 %v400, %v354
      %v402 = vmul.f32 %v399, %v355
      %s403 = scalar_lea.vmem %s2, 4
      %v404 = vld [vmem:[%s403] sm:$0xf]
      %v405 = vpack.c.bf16 %v401, %v401
      %v406 = vpack.c.bf16 %v402, %v402
      %vm407 = vcmask 64512
      %v409 = vsel %vm407, %v404, 0
      %vm411 = vcmask 1043456
      %v413 = vsel %vm411, %v405, 0
      %v416 = vsel %vm411, %v406, 0
      %418 = vmatprep.subr.bf16.mxu0 0
      %419 = vmatpush1.bf16.msra.mxu0 0
      %420 = vmatprep.subr.bf16.mxu0 0
      %421 = vmatpush1.bf16.msra.mxu0 0
      %422 = vmatprep.subr.bf16.mxu0 0
      %423 = vmatpush1.bf16.msra.mxu0 0
      %424 = vmatprep.subr.bf16.mxu0 0
      %425 = vmatpush1.bf16.msra.mxu0 0
      %426 = vmatprep.subr.bf16.mxu0 0
      %427 = vmatpush1.bf16.msra.mxu0 0
      %428 = vmatprep.subr.bf16.mxu0 0
      %429 = vmatpush1.bf16.msra.mxu0 0
      %430 = vmatprep.subr.bf16.mxu0 0
      %431 = vmatpush1.bf16.msra.mxu0 0
      %432 = vmatprep.subr.bf16.mxu0 %v416
      %433 = vmatpush1.bf16.msra.mxu0 %v413
      %434 = vmatprep.subr.bf16.mxu0 0
      %435 = vmatpush2.bf16.msra.mxu0 0
      %436 = vmatprep.subr.bf16.mxu0 0
      %437 = vmatpush2.bf16.msra.mxu0 0
      %438 = vmatprep.subr.bf16.mxu0 0
      %439 = vmatpush2.bf16.msra.mxu0 0
      %440 = vmatprep.subr.bf16.mxu0 0
      %441 = vmatpush2.bf16.msra.mxu0 0
      %442 = vmatprep.subr.bf16.mxu0 0
      %443 = vmatpush2.bf16.msra.mxu0 0
      %444 = vmatprep.subr.bf16.mxu0 0
      %445 = vmatpush2.bf16.msra.mxu0 0
      %446 = vmatprep.subr.bf16.mxu0 0
      %447 = vmatpush2.bf16.msra.mxu0 0
      %448 = vmatprep.subr.bf16.mxu0 0
      %449 = vmatpush2.bf16.msra.mxu0 0
      %450 = vmatprep.mubr.bf16.mxu0 0
      %451 = vmatmul.mubr.bf16.gmra.mxu0 %v409
      %v452 = vpop.f32.mrf.mxu0
      %v453 = vadd.f32 0.0, %v452
      %v454 = vpop.f32.mrf.mxu0
      %v455 = vadd.f32 0.0, %v454
      %v456 = vpop.f32.mrf.mxu0
      %v457 = vpop.f32.mrf.mxu0
      %458 = vdwg.mxu0
      %v460 = vsel %vm407, %v391, 0
      %v463 = vsel %vm411, %v392, 0
      %v466 = vsel %vm411, %v393, 0
      %468 = vmatprep.subr.bf16.mxu0 0
      %469 = vmatpush1.bf16.msra.mxu0 0
      %470 = vmatprep.subr.bf16.mxu0 0
      %471 = vmatpush1.bf16.msra.mxu0 0
      %472 = vmatprep.subr.bf16.mxu0 0
      %473 = vmatpush1.bf16.msra.mxu0 0
      %474 = vmatprep.subr.bf16.mxu0 0
      %475 = vmatpush1.bf16.msra.mxu0 0
      %476 = vmatprep.subr.bf16.mxu0 0
      %477 = vmatpush1.bf16.msra.mxu0 0
      %478 = vmatprep.subr.bf16.mxu0 0
      %479 = vmatpush1.bf16.msra.mxu0 0
      %480 = vmatprep.subr.bf16.mxu0 0
      %481 = vmatpush1.bf16.msra.mxu0 0
      %482 = vmatprep.subr.bf16.mxu0 %v466
      %483 = vmatpush1.bf16.msra.mxu0 %v463
      %484 = vmatprep.subr.bf16.mxu0 0
      %485 = vmatpush2.bf16.msra.mxu0 0
      %486 = vmatprep.subr.bf16.mxu0 0
      %487 = vmatpush2.bf16.msra.mxu0 0
      %488 = vmatprep.subr.bf16.mxu0 0
      %489 = vmatpush2.bf16.msra.mxu0 0
      %490 = vmatprep.subr.bf16.mxu0 0
      %491 = vmatpush2.bf16.msra.mxu0 0
      %492 = vmatprep.subr.bf16.mxu0 0
      %493 = vmatpush2.bf16.msra.mxu0 0
      %494 = vmatprep.subr.bf16.mxu0 0
      %495 = vmatpush2.bf16.msra.mxu0 0
      %496 = vmatprep.subr.bf16.mxu0 0
      %497 = vmatpush2.bf16.msra.mxu0 0
      %498 = vmatprep.subr.bf16.mxu0 0
      %499 = vmatpush2.bf16.msra.mxu0 0
      %500 = vmatprep.mubr.bf16.mxu0 0
      %501 = vmatmul.mubr.bf16.gmra.mxu0 %v460
      %v502 = vpop.f32.mrf.mxu0
      %v503 = vadd.f32 %v453, %v502
      %v504 = vpop.f32.mrf.mxu0
      %v505 = vadd.f32 %v455, %v504
      %v506 = vpop.f32.mrf.mxu0
      %v507 = vpop.f32.mrf.mxu0
      %508 = vdwg.mxu0
      %509 = vrot.lane.b32.xlu0 %v297, 15
      %v510 = vpop.permute.xlu0 %509
      %511 = vrot.lane.b32.xlu0 %v298, 15
      %v512 = vpop.permute.xlu0 %511
      %vm513 = vcmp.lt.s32.totalorder %v300, 15
      %v514 = vsel %vm513, %v510, %v512
      %v515 = vsel %vm513, %v512, %v510
      %v516 = vmul.f32 %v515, %v376
      %v517 = vmul.f32 %v514, %v377
      %s518 = scalar_lea.vmem %s2, 8
      %v519 = vld [vmem:[%s518] sm:$0xf]
      %v520 = vpack.c.bf16 %v516, %v516
      %v521 = vpack.c.bf16 %v517, %v517
      %v523 = vsel %vm407, %v519, 0
      %v526 = vsel %vm411, %v520, 0
      %v529 = vsel %vm411, %v521, 0
      %531 = vmatprep.subr.bf16.mxu0 0
      %532 = vmatpush1.bf16.msra.mxu0 0
      %533 = vmatprep.subr.bf16.mxu0 0
      %534 = vmatpush1.bf16.msra.mxu0 0
      %535 = vmatprep.subr.bf16.mxu0 0
      %536 = vmatpush1.bf16.msra.mxu0 0
      %537 = vmatprep.subr.bf16.mxu0 0
      %538 = vmatpush1.bf16.msra.mxu0 0
      %539 = vmatprep.subr.bf16.mxu0 0
      %540 = vmatpush1.bf16.msra.mxu0 0
      %541 = vmatprep.subr.bf16.mxu0 0
      %542 = vmatpush1.bf16.msra.mxu0 0
      %543 = vmatprep.subr.bf16.mxu0 0
      %544 = vmatpush1.bf16.msra.mxu0 0
      %545 = vmatprep.subr.bf16.mxu0 %v529
      %546 = vmatpush1.bf16.msra.mxu0 %v526
      %547 = vmatprep.subr.bf16.mxu0 0
      %548 = vmatpush2.bf16.msra.mxu0 0
      %549 = vmatprep.subr.bf16.mxu0 0
      %550 = vmatpush2.bf16.msra.mxu0 0
      %551 = vmatprep.subr.bf16.mxu0 0
      %552 = vmatpush2.bf16.msra.mxu0 0
      %553 = vmatprep.subr.bf16.mxu0 0
      %554 = vmatpush2.bf16.msra.mxu0 0
      %555 = vmatprep.subr.bf16.mxu0 0
      %556 = vmatpush2.bf16.msra.mxu0 0
      %557 = vmatprep.subr.bf16.mxu0 0
      %558 = vmatpush2.bf16.msra.mxu0 0
      %559 = vmatprep.subr.bf16.mxu0 0
      %560 = vmatpush2.bf16.msra.mxu0 0
      %561 = vmatprep.subr.bf16.mxu0 0
      %562 = vmatpush2.bf16.msra.mxu0 0
      %563 = vmatprep.mubr.bf16.mxu0 0
      %564 = vmatmul.mubr.bf16.gmra.mxu0 %v523
      %v565 = vpop.f32.mrf.mxu0
      %v566 = vadd.f32 0.0, %v565
      %v567 = vpop.f32.mrf.mxu0
      %v568 = vadd.f32 0.0, %v567
      %v569 = vpop.f32.mrf.mxu0
      %v570 = vpop.f32.mrf.mxu0
      %571 = vdwg.mxu0
      %v572 = vadd.f32 %v503, %v566
      %v573 = vadd.f32 %v505, %v568
      %574 = vrot.lane.b32.xlu0 %v297, 1
      %v575 = vpop.permute.xlu0 %574
      %576 = vrot.lane.b32.xlu0 %v298, 1
      %v577 = vpop.permute.xlu0 %576
      %vm578 = vcmp.lt.s32.totalorder %v300, 1
      %v579 = vsel %vm578, %v575, %v577
      %v580 = vsel %vm578, %v577, %v575
      %v581 = vmul.f32 %v580, %v366
      %v582 = vmul.f32 %v579, %v367
      %s583 = scalar_lea.vmem %s2, 12
      %v584 = vld [vmem:[%s583] sm:$0xf]
      %v585 = vpack.c.bf16 %v581, %v581
      %v586 = vpack.c.bf16 %v582, %v582
      %v588 = vsel %vm407, %v584, 0
      %v591 = vsel %vm411, %v585, 0
      %v594 = vsel %vm411, %v586, 0
      %596 = vmatprep.subr.bf16.mxu0 0
      %597 = vmatpush1.bf16.msra.mxu0 0
      %598 = vmatprep.subr.bf16.mxu0 0
      %599 = vmatpush1.bf16.msra.mxu0 0
      %600 = vmatprep.subr.bf16.mxu0 0
      %601 = vmatpush1.bf16.msra.mxu0 0
      %602 = vmatprep.subr.bf16.mxu0 0
      %603 = vmatpush1.bf16.msra.mxu0 0
      %604 = vmatprep.subr.bf16.mxu0 0
      %605 = vmatpush1.bf16.msra.mxu0 0
      %606 = vmatprep.subr.bf16.mxu0 0
      %607 = vmatpush1.bf16.msra.mxu0 0
      %608 = vmatprep.subr.bf16.mxu0 0
      %609 = vmatpush1.bf16.msra.mxu0 0
      %610 = vmatprep.subr.bf16.mxu0 %v594
      %611 = vmatpush1.bf16.msra.mxu0 %v591
      %612 = vmatprep.subr.bf16.mxu0 0
      %613 = vmatpush2.bf16.msra.mxu0 0
      %614 = vmatprep.subr.bf16.mxu0 0
      %615 = vmatpush2.bf16.msra.mxu0 0
      %616 = vmatprep.subr.bf16.mxu0 0
      %617 = vmatpush2.bf16.msra.mxu0 0
      %618 = vmatprep.subr.bf16.mxu0 0
      %619 = vmatpush2.bf16.msra.mxu0 0
      %620 = vmatprep.subr.bf16.mxu0 0
      %621 = vmatpush2.bf16.msra.mxu0 0
      %622 = vmatprep.subr.bf16.mxu0 0
      %623 = vmatpush2.bf16.msra.mxu0 0
      %624 = vmatprep.subr.bf16.mxu0 0
      %625 = vmatpush2.bf16.msra.mxu0 0
      %626 = vmatprep.subr.bf16.mxu0 0
      %627 = vmatpush2.bf16.msra.mxu0 0
      %628 = vmatprep.mubr.bf16.mxu0 0
      %629 = vmatmul.mubr.bf16.gmra.mxu0 %v588
      %v630 = vpop.f32.mrf.mxu0
      %v631 = vadd.f32 0.0, %v630
      %v632 = vpop.f32.mrf.mxu0
      %v633 = vadd.f32 0.0, %v632
      %v634 = vpop.f32.mrf.mxu0
      %v635 = vpop.f32.mrf.mxu0
      %636 = vdwg.mxu0
      %v637 = vadd.f32 %v572, %v631
      %v638 = vadd.f32 %v573, %v633
      %s639 = scalar_lea.vmem %s2, 16
      %v640 = vld [vmem:[%s639] sm:$0xf]
      %v641 = vpack.c.bf16 %v297, %v297
      %v642 = vpack.c.bf16 %v298, %v298
      %v644 = vsel %vm407, %v640, 0
      %v647 = vsel %vm411, %v641, 0
      %v650 = vsel %vm411, %v642, 0
      %652 = vmatprep.subr.bf16.mxu0 0
      %653 = vmatpush1.bf16.msra.mxu0 0
      %654 = vmatprep.subr.bf16.mxu0 0
      %655 = vmatpush1.bf16.msra.mxu0 0
      %656 = vmatprep.subr.bf16.mxu0 0
      %657 = vmatpush1.bf16.msra.mxu0 0
      %658 = vmatprep.subr.bf16.mxu0 0
      %659 = vmatpush1.bf16.msra.mxu0 0
      %660 = vmatprep.subr.bf16.mxu0 0
      %661 = vmatpush1.bf16.msra.mxu0 0
      %662 = vmatprep.subr.bf16.mxu0 0
      %663 = vmatpush1.bf16.msra.mxu0 0
      %664 = vmatprep.subr.bf16.mxu0 0
      %665 = vmatpush1.bf16.msra.mxu0 0
      %666 = vmatprep.subr.bf16.mxu0 %v650
      %667 = vmatpush1.bf16.msra.mxu0 %v647
      %668 = vmatprep.subr.bf16.mxu0 0
      %669 = vmatpush2.bf16.msra.mxu0 0
      %670 = vmatprep.subr.bf16.mxu0 0
      %671 = vmatpush2.bf16.msra.mxu0 0
      %672 = vmatprep.subr.bf16.mxu0 0
      %673 = vmatpush2.bf16.msra.mxu0 0
      %674 = vmatprep.subr.bf16.mxu0 0
      %675 = vmatpush2.bf16.msra.mxu0 0
      %676 = vmatprep.subr.bf16.mxu0 0
      %677 = vmatpush2.bf16.msra.mxu0 0
      %678 = vmatprep.subr.bf16.mxu0 0
      %679 = vmatpush2.bf16.msra.mxu0 0
      %680 = vmatprep.subr.bf16.mxu0 0
      %681 = vmatpush2.bf16.msra.mxu0 0
      %682 = vmatprep.subr.bf16.mxu0 0
      %683 = vmatpush2.bf16.msra.mxu0 0
      %684 = vmatprep.mubr.bf16.mxu0 0
      %685 = vmatmul.mubr.bf16.gmra.mxu0 %v644
      %v686 = vpop.f32.mrf.mxu0
      %v687 = vadd.f32 0.0, %v686
      %v688 = vpop.f32.mrf.mxu0
      %v689 = vadd.f32 0.0, %v688
      %v690 = vpop.f32.mrf.mxu0
      %v691 = vpop.f32.mrf.mxu0
      %692 = vdwg.mxu0
      %v693 = vadd.f32 %v637, %v687
      %v694 = vadd.f32 %v638, %v689
      %695 = vrot.lane.b32.xlu0 %v297, 127
      %v696 = vpop.permute.xlu0 %695
      %697 = vrot.lane.b32.xlu0 %v298, 127
      %v698 = vpop.permute.xlu0 %697
      %vm699 = vcmp.lt.s32.totalorder %v300, 127
      %v700 = vsel %vm699, %v696, %v698
      %v701 = vsel %vm699, %v698, %v696
      %v702 = vmul.f32 %v700, %v372
      %v703 = vmul.f32 %v701, %v373
      %s704 = scalar_lea.vmem %s2, 20
      %v705 = vld [vmem:[%s704] sm:$0xf]
      %v706 = vpack.c.bf16 %v702, %v702
      %v707 = vpack.c.bf16 %v703, %v703
      %v709 = vsel %vm407, %v705, 0
      %v712 = vsel %vm411, %v706, 0
      %v715 = vsel %vm411, %v707, 0
      %717 = vmatprep.subr.bf16.mxu0 0
      %718 = vmatpush1.bf16.msra.mxu0 0
      %719 = vmatprep.subr.bf16.mxu0 0
      %720 = vmatpush1.bf16.msra.mxu0 0
      %721 = vmatprep.subr.bf16.mxu0 0
      %722 = vmatpush1.bf16.msra.mxu0 0
      %723 = vmatprep.subr.bf16.mxu0 0
      %724 = vmatpush1.bf16.msra.mxu0 0
      %725 = vmatprep.subr.bf16.mxu0 0
      %726 = vmatpush1.bf16.msra.mxu0 0
      %727 = vmatprep.subr.bf16.mxu0 0
      %728 = vmatpush1.bf16.msra.mxu0 0
      %729 = vmatprep.subr.bf16.mxu0 0
      %730 = vmatpush1.bf16.msra.mxu0 0
      %731 = vmatprep.subr.bf16.mxu0 %v715
      %732 = vmatpush1.bf16.msra.mxu0 %v712
      %733 = vmatprep.subr.bf16.mxu0 0
      %734 = vmatpush2.bf16.msra.mxu0 0
      %735 = vmatprep.subr.bf16.mxu0 0
      %736 = vmatpush2.bf16.msra.mxu0 0
      %737 = vmatprep.subr.bf16.mxu0 0
      %738 = vmatpush2.bf16.msra.mxu0 0
      %739 = vmatprep.subr.bf16.mxu0 0
      %740 = vmatpush2.bf16.msra.mxu0 0
      %741 = vmatprep.subr.bf16.mxu0 0
      %742 = vmatpush2.bf16.msra.mxu0 0
      %743 = vmatprep.subr.bf16.mxu0 0
      %744 = vmatpush2.bf16.msra.mxu0 0
      %745 = vmatprep.subr.bf16.mxu0 0
      %746 = vmatpush2.bf16.msra.mxu0 0
      %747 = vmatprep.subr.bf16.mxu0 0
      %748 = vmatpush2.bf16.msra.mxu0 0
      %749 = vmatprep.mubr.bf16.mxu0 0
      %750 = vmatmul.mubr.bf16.gmra.mxu0 %v709
      %v751 = vpop.f32.mrf.mxu0
      %v752 = vadd.f32 0.0, %v751
      %v753 = vpop.f32.mrf.mxu0
      %v754 = vadd.f32 0.0, %v753
      %v755 = vpop.f32.mrf.mxu0
      %v756 = vpop.f32.mrf.mxu0
      %757 = vdwg.mxu0
      %v758 = vadd.f32 %v693, %v752
      %v759 = vadd.f32 %v694, %v754
      %760 = vrot.lane.b32.xlu0 %v297, 113
      %v761 = vpop.permute.xlu0 %760
      %762 = vrot.lane.b32.xlu0 %v298, 113
      %v763 = vpop.permute.xlu0 %762
      %vm764 = vcmp.lt.s32.totalorder %v300, 113
      %v765 = vsel %vm764, %v761, %v763
      %v766 = vsel %vm764, %v763, %v761
      %v767 = vmul.f32 %v765, %v378
      %v768 = vmul.f32 %v766, %v379
      %s769 = scalar_lea.vmem %s2, 24
      %v770 = vld [vmem:[%s769] sm:$0xf]
      %v771 = vpack.c.bf16 %v767, %v767
      %v772 = vpack.c.bf16 %v768, %v768
      %v774 = vsel %vm407, %v770, 0
      %v777 = vsel %vm411, %v771, 0
      %v780 = vsel %vm411, %v772, 0
      %782 = vmatprep.subr.bf16.mxu0 0
      %783 = vmatpush1.bf16.msra.mxu0 0
      %784 = vmatprep.subr.bf16.mxu0 0
      %785 = vmatpush1.bf16.msra.mxu0 0
      %786 = vmatprep.subr.bf16.mxu0 0
      %787 = vmatpush1.bf16.msra.mxu0 0
      %788 = vmatprep.subr.bf16.mxu0 0
      %789 = vmatpush1.bf16.msra.mxu0 0
      %790 = vmatprep.subr.bf16.mxu0 0
      %791 = vmatpush1.bf16.msra.mxu0 0
      %792 = vmatprep.subr.bf16.mxu0 0
      %793 = vmatpush1.bf16.msra.mxu0 0
      %794 = vmatprep.subr.bf16.mxu0 0
      %795 = vmatpush1.bf16.msra.mxu0 0
      %796 = vmatprep.subr.bf16.mxu0 %v780
      %797 = vmatpush1.bf16.msra.mxu0 %v777
      %798 = vmatprep.subr.bf16.mxu0 0
      %799 = vmatpush2.bf16.msra.mxu0 0
      %800 = vmatprep.subr.bf16.mxu0 0
      %801 = vmatpush2.bf16.msra.mxu0 0
      %802 = vmatprep.subr.bf16.mxu0 0
      %803 = vmatpush2.bf16.msra.mxu0 0
      %804 = vmatprep.subr.bf16.mxu0 0
      %805 = vmatpush2.bf16.msra.mxu0 0
      %806 = vmatprep.subr.bf16.mxu0 0
      %807 = vmatpush2.bf16.msra.mxu0 0
      %808 = vmatprep.subr.bf16.mxu0 0
      %809 = vmatpush2.bf16.msra.mxu0 0
      %810 = vmatprep.subr.bf16.mxu0 0
      %811 = vmatpush2.bf16.msra.mxu0 0
      %812 = vmatprep.subr.bf16.mxu0 0
      %813 = vmatpush2.bf16.msra.mxu0 0
      %814 = vmatprep.mubr.bf16.mxu0 0
      %815 = vmatmul.mubr.bf16.gmra.mxu0 %v774
      %v816 = vpop.f32.mrf.mxu0
      %v817 = vadd.f32 0.0, %v816
      %v818 = vpop.f32.mrf.mxu0
      %v819 = vadd.f32 0.0, %v818
      %v820 = vpop.f32.mrf.mxu0
      %v821 = vpop.f32.mrf.mxu0
      %822 = vdwg.mxu0
      %v823 = vadd.f32 %v758, %v817
      %v824 = vadd.f32 %v759, %v819
      %825 = vrot.lane.b32.xlu0 %v297, 112
      %v826 = vpop.permute.xlu0 %825
      %827 = vrot.lane.b32.xlu0 %v298, 112
      %v828 = vpop.permute.xlu0 %827
      %vm829 = vcmp.lt.s32.totalorder %v300, 112
      %v830 = vsel %vm829, %v826, %v828
      %v831 = vsel %vm829, %v828, %v826
      %v832 = vmul.f32 %v830, %v360
      %v833 = vmul.f32 %v831, %v361
      %s834 = scalar_lea.vmem %s2, 28
      %v835 = vld [vmem:[%s834] sm:$0xf]
      %v836 = vpack.c.bf16 %v832, %v832
      %v837 = vpack.c.bf16 %v833, %v833
      %v839 = vsel %vm407, %v835, 0
      %v842 = vsel %vm411, %v836, 0
      %v845 = vsel %vm411, %v837, 0
      %847 = vmatprep.subr.bf16.mxu0 0
      %848 = vmatpush1.bf16.msra.mxu0 0
      %849 = vmatprep.subr.bf16.mxu0 0
      %850 = vmatpush1.bf16.msra.mxu0 0
      %851 = vmatprep.subr.bf16.mxu0 0
      %852 = vmatpush1.bf16.msra.mxu0 0
      %853 = vmatprep.subr.bf16.mxu0 0
      %854 = vmatpush1.bf16.msra.mxu0 0
      %855 = vmatprep.subr.bf16.mxu0 0
      %856 = vmatpush1.bf16.msra.mxu0 0
      %857 = vmatprep.subr.bf16.mxu0 0
      %858 = vmatpush1.bf16.msra.mxu0 0
      %859 = vmatprep.subr.bf16.mxu0 0
      %860 = vmatpush1.bf16.msra.mxu0 0
      %861 = vmatprep.subr.bf16.mxu0 %v845
      %862 = vmatpush1.bf16.msra.mxu0 %v842
      %863 = vmatprep.subr.bf16.mxu0 0
      %864 = vmatpush2.bf16.msra.mxu0 0
      %865 = vmatprep.subr.bf16.mxu0 0
      %866 = vmatpush2.bf16.msra.mxu0 0
      %867 = vmatprep.subr.bf16.mxu0 0
      %868 = vmatpush2.bf16.msra.mxu0 0
      %869 = vmatprep.subr.bf16.mxu0 0
      %870 = vmatpush2.bf16.msra.mxu0 0
      %871 = vmatprep.subr.bf16.mxu0 0
      %872 = vmatpush2.bf16.msra.mxu0 0
      %873 = vmatprep.subr.bf16.mxu0 0
      %874 = vmatpush2.bf16.msra.mxu0 0
      %875 = vmatprep.subr.bf16.mxu0 0
      %876 = vmatpush2.bf16.msra.mxu0 0
      %877 = vmatprep.subr.bf16.mxu0 0
      %878 = vmatpush2.bf16.msra.mxu0 0
      %879 = vmatprep.mubr.bf16.mxu0 0
      %880 = vmatmul.mubr.bf16.gmra.mxu0 %v839
      %v881 = vpop.f32.mrf.mxu0
      %v882 = vadd.f32 0.0, %v881
      %v883 = vpop.f32.mrf.mxu0
      %v884 = vadd.f32 0.0, %v883
      %v885 = vpop.f32.mrf.mxu0
      %v886 = vpop.f32.mrf.mxu0
      %887 = vdwg.mxu0
      %v888 = vadd.f32 %v823, %v882
      %v889 = vadd.f32 %v824, %v884
      %890 = vrot.lane.b32.xlu0 %v297, 111
      %v891 = vpop.permute.xlu0 %890
      %892 = vrot.lane.b32.xlu0 %v298, 111
      %v893 = vpop.permute.xlu0 %892
      %vm894 = vcmp.lt.s32.totalorder %v300, 111
      %v895 = vsel %vm894, %v891, %v893
      %v896 = vsel %vm894, %v893, %v891
      %v897 = vmul.f32 %v895, %v380
      %v898 = vmul.f32 %v896, %v381
      %s899 = scalar_lea.vmem %s2, 32
      %v900 = vld [vmem:[%s899] sm:$0xf]
      %v901 = vpack.c.bf16 %v897, %v897
      %v902 = vpack.c.bf16 %v898, %v898
      %v904 = vsel %vm407, %v900, 0
      %v907 = vsel %vm411, %v901, 0
      %v910 = vsel %vm411, %v902, 0
      %912 = vmatprep.subr.bf16.mxu0 0
      %913 = vmatpush1.bf16.msra.mxu0 0
      %914 = vmatprep.subr.bf16.mxu0 0
      %915 = vmatpush1.bf16.msra.mxu0 0
      %916 = vmatprep.subr.bf16.mxu0 0
      %917 = vmatpush1.bf16.msra.mxu0 0
      %918 = vmatprep.subr.bf16.mxu0 0
      %919 = vmatpush1.bf16.msra.mxu0 0
      %920 = vmatprep.subr.bf16.mxu0 0
      %921 = vmatpush1.bf16.msra.mxu0 0
      %922 = vmatprep.subr.bf16.mxu0 0
      %923 = vmatpush1.bf16.msra.mxu0 0
      %924 = vmatprep.subr.bf16.mxu0 0
      %925 = vmatpush1.bf16.msra.mxu0 0
      %926 = vmatprep.subr.bf16.mxu0 %v910
      %927 = vmatpush1.bf16.msra.mxu0 %v907
      %928 = vmatprep.subr.bf16.mxu0 0
      %929 = vmatpush2.bf16.msra.mxu0 0
      %930 = vmatprep.subr.bf16.mxu0 0
      %931 = vmatpush2.bf16.msra.mxu0 0
      %932 = vmatprep.subr.bf16.mxu0 0
      %933 = vmatpush2.bf16.msra.mxu0 0
      %934 = vmatprep.subr.bf16.mxu0 0
      %935 = vmatpush2.bf16.msra.mxu0 0
      %936 = vmatprep.subr.bf16.mxu0 0
      %937 = vmatpush2.bf16.msra.mxu0 0
      %938 = vmatprep.subr.bf16.mxu0 0
      %939 = vmatpush2.bf16.msra.mxu0 0
      %940 = vmatprep.subr.bf16.mxu0 0
      %941 = vmatpush2.bf16.msra.mxu0 0
      %942 = vmatprep.subr.bf16.mxu0 0
      %943 = vmatpush2.bf16.msra.mxu0 0
      %944 = vmatprep.mubr.bf16.mxu0 0
      %945 = vmatmul.mubr.bf16.gmra.mxu0 %v904
      %v946 = vpop.f32.mrf.mxu0
      %v947 = vadd.f32 0.0, %v946
      %v948 = vpop.f32.mrf.mxu0
      %v949 = vadd.f32 0.0, %v948
      %v950 = vpop.f32.mrf.mxu0
      %v951 = vpop.f32.mrf.mxu0
      %952 = vdwg.mxu0
      %v953 = vadd.f32 %v888, %v947
      %v954 = vadd.f32 %v889, %v949
      %v955 = vadd.f32 %v953, %v954
      %956 = vadd.xlane.f32.xlu0 %v955
      %v957 = vpop.xlane.xlu0 %956
      %vm958 = vcmask 7168
      %959 = vst.msk [vmem:[%s271] sm:$0xff] %vm958, %v957
      %v960 = vmul.f32 %v953, %v953
      %v961 = vmul.f32 %v954, %v954
      %v962 = vadd.f32 %v960, %v961
      %963 = vadd.xlane.f32.xlu0 %v962
      %v964 = vpop.xlane.xlu0 %963
      %965 = vst.msk [vmem:[%s275] sm:$0xff] %vm958, %v964
      %966 = vst [vmem:[%s266] sm:$0xff] %v953
      %967 = vst [vmem:[%s266 + $0x8] sm:$0xff] %v954
      %s968 = smul.u32 2, %s18
      %p969 = scmp.lt.s32.totalorder %s968, 3
      %s970 = scalar_select %p969, %s968, 3
      %s971 = smul.addr %s970, 8
      %s972 = scalar_lea.vmem %s4, %s971
      %p973 = scmp.lt.s32.totalorder %s18, 1
      %s974 = scalar_select %p973, %s18, 1
      %s975 = smul.addr %s974, 8
      %s976 = scalar_lea.vmem %s5, %s975
      %p977 = scmp.lt.s32.totalorder %s18, 1
      %s978 = scalar_select %p977, %s18, 1
      %s979 = smul.addr %s978, 8
      %s980 = scalar_lea.vmem %s6, %s979
      // Predicated region
      $region37: #{resblock_forward.5} parent=35 // pred_check
        %p981 = pneg %p125
      $region38: #{resblock_forward.5} parent=35 // pred_check_branch
        %983 = sbr.rel (%p981) target = $region40
      $region39: #{resblock_forward.5} parent=35 // pred_region
        %s984 = smul.u32 2, %s18
      $region40: #{resblock_forward.5} parent=35 // pred_fallthru
        _
      // Predicated region
      $region41: #{resblock_forward.5} parent=35 // pred_check
        %p985 = pneg %p151
      $region42: #{resblock_forward.5} parent=35 // pred_check_branch
        %987 = sbr.rel (%p985) target = $region44
      $region43: #{resblock_forward.5} parent=35 // pred_region
        _
      $region44: #{resblock_forward.5} parent=35 // pred_fallthru
        _
      // Predicated region
      $region45: #{resblock_forward.5} parent=35 // pred_check
        %p988 = pneg %p177
      $region46: #{resblock_forward.5} parent=35 // pred_check_branch
        %990 = sbr.rel (%p988) target = $region48
      $region47: #{resblock_forward.5} parent=35 // pred_region
        _
      $region48: #{resblock_forward.5} parent=35 // pred_fallthru
        _
    $region36: #{resblock_forward.5} parent=5 // pred_fallthru
      _
    %p991 = scmp.le.s32.totalorder 2, %s13
    // Predicated region
    $region49: #{resblock_forward.5} parent=5 // pred_check
      %p992 = pneg %p991
    $region50: #{resblock_forward.5} parent=5 // pred_check_branch
      %994 = sbr.rel (%p992) target = $region52
    $region51: #{resblock_forward.5} parent=5 // pred_region
      %s995 = ssub.s32 %s13, 2
      // Predicated region
      $region53: #{resblock_forward.5} parent=51 // pred_check
        %p996 = pneg %p131
      $region54: #{resblock_forward.5} parent=51 // pred_check_branch
        %998 = sbr.rel (%p996) target = $region56
      $region55: #{resblock_forward.5} parent=51 // pred_region
        %s999 = smul.u32 2, %s19
        %p1000 = scmp.lt.s32.totalorder %s999, 3
        %s1001 = scalar_select %p1000, %s999, 3
        %s1002 = smul.addr %s1001, 8
        %s1003 = scalar_lea.vmem %s4, %s1002
      $region56: #{resblock_forward.5} parent=51 // pred_fallthru
        _
      // Predicated region
      $region57: #{resblock_forward.5} parent=51 // pred_check
        %p1004 = pneg %p157
      $region58: #{resblock_forward.5} parent=51 // pred_check_branch
        %1006 = sbr.rel (%p1004) target = $region60
      $region59: #{resblock_forward.5} parent=51 // pred_region
        %p1007 = scmp.lt.s32.totalorder %s19, 1
        %s1008 = scalar_select %p1007, %s19, 1
        %s1009 = smul.addr %s1008, 8
        %s1010 = scalar_lea.vmem %s5, %s1009
      $region60: #{resblock_forward.5} parent=51 // pred_fallthru
        _
      // Predicated region
      $region61: #{resblock_forward.5} parent=51 // pred_check
        %p1011 = pneg %p183
      $region62: #{resblock_forward.5} parent=51 // pred_check_branch
        %1013 = sbr.rel (%p1011) target = $region64
      $region63: #{resblock_forward.5} parent=51 // pred_region
        %p1014 = scmp.lt.s32.totalorder %s19, 1
        %s1015 = scalar_select %p1014, %s19, 1
        %s1016 = smul.addr %s1015, 8
        %s1017 = scalar_lea.vmem %s6, %s1016
      $region64: #{resblock_forward.5} parent=51 // pred_fallthru
        _
    $region52: #{resblock_forward.5} parent=5 // pred_fallthru
      _
  $region6: #{resblock_forward.5} parent=0 // loop_footer
    %s17 = sadd.s32 1, %s13
  $region7: #{resblock_forward.5} parent=0 // loop_footer_branch
    %12 = sbr.rel target = $region3
  $region8: #{resblock_forward.5} parent=0 // loop_exit
    _

</llo_original>
